<compile_context>
chip_gen: v5e
topology: v5e:2x2
jax: 0.10.0
libtpu: 0.0.40
codegen_flags: <defaults>
</compile_context>

<pallas_src>
import math
import functools

import jax
import jax.numpy as jnp
import numpy as np
from jax.experimental import pallas as pl
from jax.experimental.pallas import tpu as pltpu


# ----------------------------------------------------------------------------
# Pallas kernel: cross attention aggregation for a block of person-groups.
# ----------------------------------------------------------------------------
def _cross_attn_kernel(a_sub_ref, a_act_ref, b_sub_ref, b_act_ref,
                       wq_ref, bq_ref, wkv_ref, bkv_ref, o_ref,
                       *, block_b, n_person, seq_len, ch, c_out, mxu_dtype):
    L = seq_len
    P = n_person
    Bt = block_b

    # Weights loaded / prepared once per grid step (hoisted out of the two
    # direction evaluations).
    wq = wq_ref[...].astype(mxu_dtype)                                  # [ch, ch] (1/sqrt(ch) folded)
    bq = bq_ref[...]                                                    # [1, ch]  f32 (scale folded)
    wkv_b = jnp.broadcast_to(
        wkv_ref[...].astype(mxu_dtype)[None], (Bt, ch + c_out, ch))     # [Bt, ch+C, ch]
    bkv = bkv_ref[...]                                                  # [ch+C, 1] f32

    inv_scale = float(L * P)   # folds mean over queries AND persons into the reciprocal

    def one_direction(act_cf, sub_cf):
        # act_cf (query source) / sub_cf (key+value source): [Bt, ch, L] channels-first.
        # --- q path: the only activation relayout in the kernel (one transpose
        #     of one tensor), then a plain 2D matmul.
        act_cl = jnp.swapaxes(act_cf, 1, 2).reshape(Bt * L, ch)          # [Bt*L, ch]
        q2d = jnp.dot(act_cl.astype(mxu_dtype), wq,
                      preferred_element_type=jnp.float32) + bq           # [Bt*L, ch]
        q_cl = q2d.reshape(Bt, L, ch)                                    # [Bt, L, ch]

        # --- k/v path: stays channels-first; fused Wk|Wv projection as a
        #     batched matmul with the weight broadcast over the batch
        #     (no activation relayout, contraction over the channel axis).
        kv_cf = jnp.einsum('boc,bcl->bol', wkv_b, sub_cf.astype(mxu_dtype),
                           preferred_element_type=jnp.float32) + bkv     # [Bt, ch+C, L]
        k_cf = kv_cf[:, :ch, :]                                          # [Bt, ch, L]
        v_cf = kv_cf[:, ch:, :]                                          # [Bt, C,  L]

        # --- logits: q (channels-last) x k (channels-first); keys on lanes ---
        logits = jnp.einsum('blc,bcm->blm',
                            q_cl.astype(mxu_dtype), k_cf.astype(mxu_dtype),
                            preferred_element_type=jnp.float32)          # [Bt, L, L]
        # TODO(synk): kv-tile this block (online max/sum) before scaling T*V up.
        m_row = jnp.max(logits, axis=-1, keepdims=True)
        p = jnp.exp(logits - m_row)                                      # [Bt, L, L]
        denom = jnp.sum(p, axis=-1, keepdims=True)                       # [Bt, L, 1]
        inv = pl.reciprocal(denom * inv_scale, approx=False)             # exact: f32 parity
        inv_row = inv.reshape(Bt, 1, L)                                  # same element order

        # mean over queries as an MXU contraction (instead of p*inv + sublane reduce)
        w = jnp.einsum('bql,blm->bqm',
                       inv_row.astype(mxu_dtype), p.astype(mxu_dtype),
                       preferred_element_type=jnp.float32)               # [Bt, 1, L]
        out = jnp.einsum('bqm,bcm->bqc',
                         w.astype(mxu_dtype), v_cf.astype(mxu_dtype),
                         preferred_element_type=jnp.float32)[:, 0, :]    # [Bt, C]

        # per-person mean folded into the kernel (the 1/P is already in `inv`)
        return out.reshape(Bt // P, P, c_out).sum(axis=1)                # [Bt/P, C]

    out_a = one_direction(a_act_ref[...], b_sub_ref[...])
    out_b = one_direction(b_act_ref[...], a_sub_ref[...])
    # Merged output: columns [0:C] = cross_a, [C:2C] = cross_b (lane-dense for C>=64).
    o_ref[...] = jnp.concatenate([out_a, out_b], axis=-1)


# ----------------------------------------------------------------------------
# Block planning: VMEM-budgeted block size, v7x megacore split, group padding.
# ----------------------------------------------------------------------------
def _is_v7x():
    try:
        return "v7" in jax.devices()[0].device_kind.lower()
    except Exception:
        return False


def _plan_blocks(batch, n_person, ch, c_out, seq_len):
    P, L = n_person, seq_len
    if batch % P != 0:
        raise ValueError(f"batch {batch} must be divisible by n_person={P}")
    groups = batch // P

    # Conservative per-batch-element working set (f32 bytes): both directions'
    # q/kv/logits/p intermediates + double-buffered input tiles.
    per_elem = 4 * (2 * (L * (3 * ch + c_out) + 2 * L * L) + 8 * ch * L)
    per_group = per_elem * P

    try:
        vmem_cap = int(pltpu.get_tpu_info().vmem_capacity_bytes)
    except Exception:
        vmem_cap = 64 * 1024 * 1024          # v7x-safe fallback

    budget = int(vmem_cap * 0.45)
    gpb = max(1, min(groups, budget // max(per_group, 1)))

    # v7x has 2 TensorCores: make sure the "parallel" grid axis has >=2 blocks.
    # On v5e/v6e (single TC) keep one maximal block to amortize per-step overhead.
    if _is_v7x() and groups >= 16 and gpb >= groups:
        gpb = -(-groups // 2)
    if gpb < groups:
        # multi-block: output block's second-minor dim must be a multiple of 8
        gpb = min(groups, max(8, (gpb // 8) * 8))
    padded_groups = -(-groups // gpb) * gpb

    needed = gpb * per_group + (4 << 20)
    vmem_limit = int(min(vmem_cap * 0.9, max(32 << 20, 2 * needed)))
    return gpb, padded_groups, vmem_limit


# ----------------------------------------------------------------------------
# Forward (jitted; block plan + dtype are static).
# ----------------------------------------------------------------------------
@functools.partial(jax.jit, static_argnames=("n_person", "n_channel", "groups_per_block",
                                              "padded_groups", "vmem_limit", "mxu_dtype"))
def _cross_attn_forward(a_sub, a_act, b_sub, b_act, wq_t, bq_r, wkv_oc, bkv_col, *,
                        n_person, n_channel, groups_per_block, padded_groups,
                        vmem_limit, mxu_dtype):
    B, ch, L = a_sub.shape
    P = n_person
    c_out = n_channel
    groups = B // P
    padded_B = padded_groups * P

    if padded_B > B:
        pad = ((0, padded_B - B), (0, 0), (0, 0))
        a_sub, a_act, b_sub, b_act = [jnp.pad(x, pad) for x in (a_sub, a_act, b_sub, b_act)]

    block_b = groups_per_block * P
    num_blocks = padded_B // block_b

    feat_spec = pl.BlockSpec((block_b, ch, L), lambda i: (i, 0, 0))
    wq_spec = pl.BlockSpec((ch, ch), lambda i: (0, 0))
    bq_spec = pl.BlockSpec((1, ch), lambda i: (0, 0))
    wkv_spec = pl.BlockSpec((ch + c_out, ch), lambda i: (0, 0))
    bkv_spec = pl.BlockSpec((ch + c_out, 1), lambda i: (0, 0))
    out_spec = pl.BlockSpec((groups_per_block, 2 * c_out), lambda i: (i, 0))

    kernel = functools.partial(
        _cross_attn_kernel, block_b=block_b, n_person=P, seq_len=L, ch=ch,
        c_out=c_out, mxu_dtype=mxu_dtype)

    out = pl.pallas_call(
        kernel,
        out_shape=jax.ShapeDtypeStruct((padded_groups, 2 * c_out), jnp.float32),
        grid=(num_blocks,),
        in_specs=[feat_spec, feat_spec, feat_spec, feat_spec,
                  wq_spec, bq_spec, wkv_spec, bkv_spec],
        out_specs=out_spec,
        compiler_params=pltpu.CompilerParams(
            dimension_semantics=("parallel",),
            vmem_limit_bytes=vmem_limit),
    )(a_sub, a_act, b_sub, b_act, wq_t, bq_r, wkv_oc, bkv_col)

    out = out[:groups]                       # drop padded groups (if any)
    return out[:, :c_out], out[:, c_out:]    # (cross_a, cross_b): [N, C] each


# ----------------------------------------------------------------------------
# Module wrapper (JAX glue mirroring the PyTorch module).
# ----------------------------------------------------------------------------
class STFeatureAggrNetPallas:
    def __init__(self, n_channel, n_frame, n_joint, n_person, aggr_mode, key,
                 mxu_dtype=jnp.float32):
        self.n_channel = n_channel
        self.n_frame = n_frame
        self.n_joint = n_joint
        self.n_person = n_person
        self.aggr_mode = aggr_mode
        self.mxu_dtype = mxu_dtype
        if aggr_mode == "cross_attn":
            ch = n_channel // 2
            k = jax.random.split(key, 6)
            # Deterministic synthetic init (stand-in for torch's Linear init);
            # weights stored in the torch [out, in] convention.
            self.params = {
                "wq": 0.1 * jax.random.normal(k[0], (ch, ch), jnp.float32),
                "bq": 0.1 * jax.random.normal(k[1], (ch,), jnp.float32),
                "wk": 0.1 * jax.random.normal(k[2], (ch, ch), jnp.float32),
                "bk": 0.1 * jax.random.normal(k[3], (ch,), jnp.float32),
                "wv": 0.1 * jax.random.normal(k[4], (n_channel, ch), jnp.float32),
                "bv": 0.1 * jax.random.normal(k[5], (n_channel,), jnp.float32),
            }
            # One-time kernel-layout weight prep:
            #  - q weight transposed to [in, out] with the 1/sqrt(ch) softmax scale folded in,
            #  - Wk|Wv fused along the output axis, kept [out, in] for the
            #    channels-first batched projection, bias as a column.
            scale = 1.0 / math.sqrt(ch)
            self.wq_t = (self.params["wq"].T * scale).astype(jnp.float32)                # [ch, ch]
            self.bq_r = (self.params["bq"] * scale).reshape(1, ch).astype(jnp.float32)   # [1, ch]
            self.wkv_oc = jnp.concatenate(
                [self.params["wk"], self.params["wv"]], axis=0).astype(jnp.float32)      # [ch+C, ch]
            self.bkv_col = jnp.concatenate(
                [self.params["bk"], self.params["bv"]]).reshape(ch + n_channel, 1).astype(jnp.float32)
        else:
            # TODO(synk): 'concat' / 'element_wise' / 'original_s2a' aggr modes not ported.
            raise NotImplementedError(f"aggr_mode {aggr_mode} not implemented in Pallas port")

    def __call__(self, feat_a, feat_b):
        a_subject, a_action = feat_a
        b_subject, b_action = feat_b

        # torch: x.squeeze() (drops the singleton person axis) -> [B, C/2, T*V].
        # The permute(0, 2, 1) is handled inside the kernel (q path only).
        sq = lambda x: jnp.squeeze(x, axis=1).astype(jnp.float32)
        a_sub, a_act, b_sub, b_act = sq(a_subject), sq(a_action), sq(b_subject), sq(b_action)

        B, ch, L = a_sub.shape
        gpb, padded_groups, vmem_limit = _plan_blocks(B, self.n_person, ch, self.n_channel, L)
        return _cross_attn_forward(
            a_sub, a_act, b_sub, b_act,
            self.wq_t, self.bq_r, self.wkv_oc, self.bkv_col,
            n_person=self.n_person, n_channel=self.n_channel,
            groups_per_block=gpb, padded_groups=padded_groups,
            vmem_limit=vmem_limit, mxu_dtype=self.mxu_dtype)


# ----------------------------------------------------------------------------
# Pure-JAX reference (mirrors the PyTorch math) for correctness checking.
# ----------------------------------------------------------------------------
def reference_cross_attn(feat_a, feat_b, params, n_channel, n_person):
    a_subject, a_action = feat_a
    b_subject, b_action = feat_b
    sp = lambda x: jnp.transpose(jnp.squeeze(x, axis=1), (0, 2, 1)).astype(jnp.float32)
    a_sub, a_act, b_sub, b_act = sp(a_subject), sp(a_action), sp(b_subject), sp(b_action)
    lin = lambda x, w, b: x @ w.T + b
    ch = n_channel // 2

    xa_q = lin(a_act, params["wq"], params["bq"])
    xa_k = lin(b_sub, params["wk"], params["bk"])
    xa_v = lin(b_sub, params["wv"], params["bv"])
    xb_q = lin(b_act, params["wq"], params["bq"])
    xb_k = lin(a_sub, params["wk"], params["bk"])
    xb_v = lin(a_sub, params["wv"], params["bv"])

    attn_a = jax.nn.softmax(jnp.einsum("blc,bkc->blk", xa_q, xa_k) / math.sqrt(ch), axis=-1)
    attn_b = jax.nn.softmax(jnp.einsum("blc,bkc->blk", xb_q, xb_k) / math.sqrt(ch), axis=-1)
    cross_a = jnp.einsum("blk,bkc->blc", attn_a, xa_v).mean(axis=-2)
    cross_b = jnp.einsum("blk,bkc->blc", attn_b, xb_v).mean(axis=-2)
    cross_a = cross_a.reshape(-1, n_person, n_channel).mean(axis=-2)
    cross_b = cross_b.reshape(-1, n_person, n_channel).mean(axis=-2)
    return cross_a, cross_b


if __name__ == "__main__":
    # Small, forward-consistent shapes.
    n_channel = 32            # C (output channels); inputs carry C/2 = 16
    n_frame, n_joint = 4, 8   # T, V  -> L = T*V = 32
    n_person = 2              # M
    n_seq = 2                 # groups after .view(-1, n_person, C)
    B = n_seq * n_person      # flattened batch seen by the cross_attn path
    L = n_frame * n_joint
    ch = n_channel // 2

    key = jax.random.PRNGKey(0)
    k_mod, k_as, k_aa, k_bs, k_ba = jax.random.split(key, 5)

    # Inputs: [B, 1, C/2, T*V]  (squeeze removes the singleton person dim,
    # matching the module's cross_attn-path expectations).
    a_subject = jax.random.normal(k_as, (B, 1, ch, L), jnp.float32)
    a_action = jax.random.normal(k_aa, (B, 1, ch, L), jnp.float32)
    b_subject = jax.random.normal(k_bs, (B, 1, ch, L), jnp.float32)
    b_action = jax.random.normal(k_ba, (B, 1, ch, L), jnp.float32)
    feat_a = (a_subject, a_action)
    feat_b = (b_subject, b_action)

    # --- f32 MXU path: exact parity check against the reference ---
    net = STFeatureAggrNetPallas(n_channel, n_frame, n_joint, n_person,
                                 aggr_mode="cross_attn", key=k_mod,
                                 mxu_dtype=jnp.float32)
    cross_a, cross_b = net(feat_a, feat_b)
    jax.block_until_ready((cross_a, cross_b))

    ref_a, ref_b = reference_cross_attn(feat_a, feat_b, net.params, n_channel, n_person)
    assert cross_a.shape == (n_seq, n_channel) and cross_b.shape == (n_seq, n_channel)
    np.testing.assert_allclose(np.asarray(cross_a), np.asarray(ref_a), rtol=1e-4, atol=1e-4)
    np.testing.assert_allclose(np.asarray(cross_b), np.asarray(ref_b), rtol=1e-4, atol=1e-4)

    # --- bf16 MXU path (full-rate MXU on v5e/v6e/v7x), f32 accumulation ---
    net_bf16 = STFeatureAggrNetPallas(n_channel, n_frame, n_joint, n_person,
                                      aggr_mode="cross_attn", key=k_mod,
                                      mxu_dtype=jnp.bfloat16)
    ca16, cb16 = net_bf16(feat_a, feat_b)
    jax.block_until_ready((ca16, cb16))
    np.testing.assert_allclose(np.asarray(ca16), np.asarray(ref_a), rtol=2e-2, atol=2e-2)
    np.testing.assert_allclose(np.asarray(cb16), np.asarray(ref_b), rtol=2e-2, atol=2e-2)

    print("KERNEL_OK")
</pallas_src>

<mosaic_0001>
module attributes {stable_mosaic.version = 11 : i64} {
  func.func @_cross_attn_kernel(%arg0: i32, %arg1: memref<4x16x32xf32, #tpu.memory_space<vmem>>, %arg2: memref<4x16x32xf32, #tpu.memory_space<vmem>>, %arg3: memref<4x16x32xf32, #tpu.memory_space<vmem>>, %arg4: memref<4x16x32xf32, #tpu.memory_space<vmem>>, %arg5: memref<16x16xf32, #tpu.memory_space<vmem>>, %arg6: memref<1x16xf32, #tpu.memory_space<vmem>>, %arg7: memref<48x16xf32, #tpu.memory_space<vmem>>, %arg8: memref<48x1xf32, #tpu.memory_space<vmem>>, %arg9: memref<2x64xf32, #tpu.memory_space<vmem>>) attributes {dimension_semantics = [#tpu.dimension_semantics<parallel>], iteration_bounds = array<i64: 1>, scalar_prefetch = 0 : i64, scratch_operands = 0 : i64, tpu.core_type = #tpu.core_type<tc>, window_params = [{transform_indices = @transform_0, window_bounds = array<i64: 4, 16, 32>}, {transform_indices = @transform_1, window_bounds = array<i64: 4, 16, 32>}, {transform_indices = @transform_2, window_bounds = array<i64: 4, 16, 32>}, {transform_indices = @transform_3, window_bounds = array<i64: 4, 16, 32>}, {pipeline_mode = #tpu.pipeline_mode<synchronous>, transform_indices = @transform_4, window_bounds = array<i64: 16, 16>}, {pipeline_mode = #tpu.pipeline_mode<synchronous>, transform_indices = @transform_5, window_bounds = array<i64: 1, 16>}, {pipeline_mode = #tpu.pipeline_mode<synchronous>, transform_indices = @transform_6, window_bounds = array<i64: 48, 16>}, {pipeline_mode = #tpu.pipeline_mode<synchronous>, transform_indices = @transform_7, window_bounds = array<i64: 48, 1>}, {transform_indices = @transform_8, window_bounds = array<i64: 2, 64>}]} {
    %c0 = arith.constant 0 : index
    %c0_0 = arith.constant 0 : index
    %0 = vector.load %arg5[%c0, %c0_0] : memref<16x16xf32, #tpu.memory_space<vmem>>, vector<16x16xf32>
    %c0_1 = arith.constant 0 : index
    %c0_2 = arith.constant 0 : index
    %1 = vector.load %arg6[%c0_1, %c0_2] : memref<1x16xf32, #tpu.memory_space<vmem>>, vector<1x16xf32>
    %c0_3 = arith.constant 0 : index
    %c0_4 = arith.constant 0 : index
    %2 = vector.load %arg7[%c0_3, %c0_4] : memref<48x16xf32, #tpu.memory_space<vmem>>, vector<48x16xf32>
    %3 = vector.shape_cast %2 : vector<48x16xf32> to vector<1x48x16xf32>
    %4 = vector.shape_cast %3 : vector<1x48x16xf32> to vector<1x48x16xf32>
    %5 = vector.broadcast %4 : vector<1x48x16xf32> to vector<4x48x16xf32>
    %c0_5 = arith.constant 0 : index
    %c0_6 = arith.constant 0 : index
    %6 = vector.load %arg8[%c0_5, %c0_6] : memref<48x1xf32, #tpu.memory_space<vmem>>, vector<48x1xf32>
    %c0_7 = arith.constant 0 : index
    %c0_8 = arith.constant 0 : index
    %c0_9 = arith.constant 0 : index
    %7 = vector.load %arg2[%c0_7, %c0_8, %c0_9] : memref<4x16x32xf32, #tpu.memory_space<vmem>>, vector<4x16x32xf32>
    %c0_10 = arith.constant 0 : index
    %c0_11 = arith.constant 0 : index
    %c0_12 = arith.constant 0 : index
    %8 = vector.load %arg3[%c0_10, %c0_11, %c0_12] : memref<4x16x32xf32, #tpu.memory_space<vmem>>, vector<4x16x32xf32>
    %9 = tpu.transpose %7, [0, 2, 1] : vector<4x16x32xf32> -> vector<4x32x16xf32>
    %10 = vector.shape_cast %9 : vector<4x32x16xf32> to vector<128x16xf32>
    %cst = arith.constant dense<0.000000e+00> : vector<128x16xf32>
    %11 = tpu.matmul %10, %0, %cst {dimension_numbers = #tpu.dot_dimension_numbers<[1], [0], [0], [1], [0, 0, 1, 1], [], []>} : vector<128x16xf32>, vector<16x16xf32>, vector<128x16xf32> -> vector<128x16xf32>
    %12 = vector.broadcast %1 : vector<1x16xf32> to vector<128x16xf32>
    %13 = arith.addf %11, %12 : vector<128x16xf32>
    %14 = vector.shape_cast %13 : vector<128x16xf32> to vector<4x32x16xf32>
    "tpu.trace_start"() <{level = 10 : i32, message = "boc,bcl->bol"}> : () -> ()
    %cst_13 = arith.constant dense<0.000000e+00> : vector<4x48x32xf32>
    %15 = tpu.matmul %5, %8, %cst_13 {dimension_numbers = #tpu.dot_dimension_numbers<[2], [1], [1], [2], [0, 0, 0, 1, 1, 2], [0], [0]>} : vector<4x48x16xf32>, vector<4x16x32xf32>, vector<4x48x32xf32> -> vector<4x48x32xf32>
    "tpu.trace_stop"() : () -> ()
    %16 = vector.shape_cast %6 : vector<48x1xf32> to vector<1x48x1xf32>
    %17 = vector.broadcast %16 : vector<1x48x1xf32> to vector<4x48x32xf32>
    %18 = arith.addf %15, %17 : vector<4x48x32xf32>
    %19 = vector.extract_strided_slice %18 {offsets = [0, 0, 0], sizes = [4, 16, 32], strides = [1, 1, 1]} : vector<4x48x32xf32> to vector<4x16x32xf32>
    %20 = vector.extract_strided_slice %18 {offsets = [0, 16, 0], sizes = [4, 32, 32], strides = [1, 1, 1]} : vector<4x48x32xf32> to vector<4x32x32xf32>
    "tpu.trace_start"() <{level = 10 : i32, message = "blc,bcm->blm"}> : () -> ()
    %cst_14 = arith.constant dense<0.000000e+00> : vector<4x32x32xf32>
    %21 = tpu.matmul %14, %19, %cst_14 {dimension_numbers = #tpu.dot_dimension_numbers<[2], [1], [1], [2], [0, 0, 0, 1, 1, 2], [0], [0]>} : vector<4x32x16xf32>, vector<4x16x32xf32>, vector<4x32x32xf32> -> vector<4x32x32xf32>
    "tpu.trace_stop"() : () -> ()
    %cst_15 = arith.constant dense<0xFF800000> : vector<4x32xf32>
    %22 = vector.multi_reduction <maximumf>, %21, %cst_15 [2] : vector<4x32x32xf32> to vector<4x32xf32>
    %23 = vector.shape_cast %22 : vector<4x32xf32> to vector<4x32x1xf32>
    %24 = vector.broadcast %23 : vector<4x32x1xf32> to vector<4x32x32xf32>
    %25 = arith.subf %21, %24 : vector<4x32x32xf32>
    %26 = math.exp %25 : vector<4x32x32xf32>
    %cst_16 = arith.constant dense<0.000000e+00> : vector<4x32xf32>
    %27 = vector.multi_reduction <add>, %26, %cst_16 [2] : vector<4x32x32xf32> to vector<4x32xf32>
    %28 = vector.shape_cast %27 : vector<4x32xf32> to vector<4x32x1xf32>
    %cst_17 = arith.constant 6.400000e+01 : f32
    %29 = vector.broadcast %cst_17 : f32 to vector<4x32x1xf32>
    %30 = arith.mulf %28, %29 : vector<4x32x1xf32>
    %31 = tpu.reciprocal %30 : vector<4x32x1xf32> -> vector<4x32x1xf32>
    %32 = vector.shape_cast %31 : vector<4x32x1xf32> to vector<4x1x32xf32>
    "tpu.trace_start"() <{level = 10 : i32, message = "bql,blm->bqm"}> : () -> ()
    %cst_18 = arith.constant dense<0.000000e+00> : vector<4x1x32xf32>
    %33 = tpu.matmul %32, %26, %cst_18 {dimension_numbers = #tpu.dot_dimension_numbers<[2], [1], [1], [2], [0, 0, 0, 1, 1, 2], [0], [0]>} : vector<4x1x32xf32>, vector<4x32x32xf32>, vector<4x1x32xf32> -> vector<4x1x32xf32>
    "tpu.trace_stop"() : () -> ()
    "tpu.trace_start"() <{level = 10 : i32, message = "bqm,bcm->bqc"}> : () -> ()
    %cst_19 = arith.constant dense<0.000000e+00> : vector<4x1x32xf32>
    %34 = tpu.matmul %33, %20, %cst_19 {dimension_numbers = #tpu.dot_dimension_numbers<[2], [2], [1], [1], [0, 0, 0, 1, 1, 1], [0], [0]>} : vector<4x1x32xf32>, vector<4x32x32xf32>, vector<4x1x32xf32> -> vector<4x1x32xf32>
    "tpu.trace_stop"() : () -> ()
    %35 = vector.shape_cast %34 : vector<4x1x32xf32> to vector<4x32xf32>
    %36 = vector.shape_cast %35 : vector<4x32xf32> to vector<2x2x32xf32>
    %cst_20 = arith.constant dense<0.000000e+00> : vector<2x32xf32>
    %37 = vector.multi_reduction <add>, %36, %cst_20 [1] : vector<2x2x32xf32> to vector<2x32xf32>
    %c0_21 = arith.constant 0 : index
    %c0_22 = arith.constant 0 : index
    %c0_23 = arith.constant 0 : index
    %38 = vector.load %arg4[%c0_21, %c0_22, %c0_23] : memref<4x16x32xf32, #tpu.memory_space<vmem>>, vector<4x16x32xf32>
    %c0_24 = arith.constant 0 : index
    %c0_25 = arith.constant 0 : index
    %c0_26 = arith.constant 0 : index
    %39 = vector.load %arg1[%c0_24, %c0_25, %c0_26] : memref<4x16x32xf32, #tpu.memory_space<vmem>>, vector<4x16x32xf32>
    %40 = tpu.transpose %38, [0, 2, 1] : vector<4x16x32xf32> -> vector<4x32x16xf32>
    %41 = vector.shape_cast %40 : vector<4x32x16xf32> to vector<128x16xf32>
    %cst_27 = arith.constant dense<0.000000e+00> : vector<128x16xf32>
    %42 = tpu.matmul %41, %0, %cst_27 {dimension_numbers = #tpu.dot_dimension_numbers<[1], [0], [0], [1], [0, 0, 1, 1], [], []>} : vector<128x16xf32>, vector<16x16xf32>, vector<128x16xf32> -> vector<128x16xf32>
    %43 = vector.broadcast %1 : vector<1x16xf32> to vector<128x16xf32>
    %44 = arith.addf %42, %43 : vector<128x16xf32>
    %45 = vector.shape_cast %44 : vector<128x16xf32> to vector<4x32x16xf32>
    "tpu.trace_start"() <{level = 10 : i32, message = "boc,bcl->bol"}> : () -> ()
    %cst_28 = arith.constant dense<0.000000e+00> : vector<4x48x32xf32>
    %46 = tpu.matmul %5, %39, %cst_28 {dimension_numbers = #tpu.dot_dimension_numbers<[2], [1], [1], [2], [0, 0, 0, 1, 1, 2], [0], [0]>} : vector<4x48x16xf32>, vector<4x16x32xf32>, vector<4x48x32xf32> -> vector<4x48x32xf32>
    "tpu.trace_stop"() : () -> ()
    %47 = vector.shape_cast %6 : vector<48x1xf32> to vector<1x48x1xf32>
    %48 = vector.broadcast %47 : vector<1x48x1xf32> to vector<4x48x32xf32>
    %49 = arith.addf %46, %48 : vector<4x48x32xf32>
    %50 = vector.extract_strided_slice %49 {offsets = [0, 0, 0], sizes = [4, 16, 32], strides = [1, 1, 1]} : vector<4x48x32xf32> to vector<4x16x32xf32>
    %51 = vector.extract_strided_slice %49 {offsets = [0, 16, 0], sizes = [4, 32, 32], strides = [1, 1, 1]} : vector<4x48x32xf32> to vector<4x32x32xf32>
    "tpu.trace_start"() <{level = 10 : i32, message = "blc,bcm->blm"}> : () -> ()
    %cst_29 = arith.constant dense<0.000000e+00> : vector<4x32x32xf32>
    %52 = tpu.matmul %45, %50, %cst_29 {dimension_numbers = #tpu.dot_dimension_numbers<[2], [1], [1], [2], [0, 0, 0, 1, 1, 2], [0], [0]>} : vector<4x32x16xf32>, vector<4x16x32xf32>, vector<4x32x32xf32> -> vector<4x32x32xf32>
    "tpu.trace_stop"() : () -> ()
    %cst_30 = arith.constant dense<0xFF800000> : vector<4x32xf32>
    %53 = vector.multi_reduction <maximumf>, %52, %cst_30 [2] : vector<4x32x32xf32> to vector<4x32xf32>
    %54 = vector.shape_cast %53 : vector<4x32xf32> to vector<4x32x1xf32>
    %55 = vector.broadcast %54 : vector<4x32x1xf32> to vector<4x32x32xf32>
    %56 = arith.subf %52, %55 : vector<4x32x32xf32>
    %57 = math.exp %56 : vector<4x32x32xf32>
    %cst_31 = arith.constant dense<0.000000e+00> : vector<4x32xf32>
    %58 = vector.multi_reduction <add>, %57, %cst_31 [2] : vector<4x32x32xf32> to vector<4x32xf32>
    %59 = vector.shape_cast %58 : vector<4x32xf32> to vector<4x32x1xf32>
    %cst_32 = arith.constant 6.400000e+01 : f32
    %60 = vector.broadcast %cst_32 : f32 to vector<4x32x1xf32>
    %61 = arith.mulf %59, %60 : vector<4x32x1xf32>
    %62 = tpu.reciprocal %61 : vector<4x32x1xf32> -> vector<4x32x1xf32>
    %63 = vector.shape_cast %62 : vector<4x32x1xf32> to vector<4x1x32xf32>
    "tpu.trace_start"() <{level = 10 : i32, message = "bql,blm->bqm"}> : () -> ()
    %cst_33 = arith.constant dense<0.000000e+00> : vector<4x1x32xf32>
    %64 = tpu.matmul %63, %57, %cst_33 {dimension_numbers = #tpu.dot_dimension_numbers<[2], [1], [1], [2], [0, 0, 0, 1, 1, 2], [0], [0]>} : vector<4x1x32xf32>, vector<4x32x32xf32>, vector<4x1x32xf32> -> vector<4x1x32xf32>
    "tpu.trace_stop"() : () -> ()
    "tpu.trace_start"() <{level = 10 : i32, message = "bqm,bcm->bqc"}> : () -> ()
    %cst_34 = arith.constant dense<0.000000e+00> : vector<4x1x32xf32>
    %65 = tpu.matmul %64, %51, %cst_34 {dimension_numbers = #tpu.dot_dimension_numbers<[2], [2], [1], [1], [0, 0, 0, 1, 1, 1], [0], [0]>} : vector<4x1x32xf32>, vector<4x32x32xf32>, vector<4x1x32xf32> -> vector<4x1x32xf32>
    "tpu.trace_stop"() : () -> ()
    %66 = vector.shape_cast %65 : vector<4x1x32xf32> to vector<4x32xf32>
    %67 = vector.shape_cast %66 : vector<4x32xf32> to vector<2x2x32xf32>
    %cst_35 = arith.constant dense<0.000000e+00> : vector<2x32xf32>
    %68 = vector.multi_reduction <add>, %67, %cst_35 [1] : vector<2x2x32xf32> to vector<2x32xf32>
    %69 = tpu.concatenate %37, %68 in 1 : vector<2x32xf32>, vector<2x32xf32> -> vector<2x64xf32>
    %c0_36 = arith.constant 0 : index
    %c0_37 = arith.constant 0 : index
    %70 = vector.load %arg9[%c0_36, %c0_37] : memref<2x64xf32, #tpu.memory_space<vmem>>, vector<2x64xf32>
    tpu.vector_store %arg9[%c0_36, %c0_37], %69 {strides = array<i32>} : memref<2x64xf32, #tpu.memory_space<vmem>>, vector<2x64xf32>,
    return
  }
  func.func @transform_0(%arg0: i32) -> (i32, i32, i32) {
    %c0_i32 = arith.constant 0 : i32
    %c0_i32_0 = arith.constant 0 : i32
    %c0_i32_1 = arith.constant 0 : i32
    return %arg0, %c0_i32, %c0_i32_0 : i32, i32, i32
  }
  func.func @transform_1(%arg0: i32) -> (i32, i32, i32) {
    %c0_i32 = arith.constant 0 : i32
    %c0_i32_0 = arith.constant 0 : i32
    %c0_i32_1 = arith.constant 0 : i32
    return %arg0, %c0_i32, %c0_i32_0 : i32, i32, i32
  }
  func.func @transform_2(%arg0: i32) -> (i32, i32, i32) {
    %c0_i32 = arith.constant 0 : i32
    %c0_i32_0 = arith.constant 0 : i32
    %c0_i32_1 = arith.constant 0 : i32
    return %arg0, %c0_i32, %c0_i32_0 : i32, i32, i32
  }
  func.func @transform_3(%arg0: i32) -> (i32, i32, i32) {
    %c0_i32 = arith.constant 0 : i32
    %c0_i32_0 = arith.constant 0 : i32
    %c0_i32_1 = arith.constant 0 : i32
    return %arg0, %c0_i32, %c0_i32_0 : i32, i32, i32
  }
  func.func @transform_4(%arg0: i32) -> (i32, i32) {
    %c0_i32 = arith.constant 0 : i32
    %c0_i32_0 = arith.constant 0 : i32
    %c0_i32_1 = arith.constant 0 : i32
    return %c0_i32, %c0_i32_0 : i32, i32
  }
  func.func @transform_5(%arg0: i32) -> (i32, i32) {
    %c0_i32 = arith.constant 0 : i32
    %c0_i32_0 = arith.constant 0 : i32
    %c0_i32_1 = arith.constant 0 : i32
    return %c0_i32, %c0_i32_0 : i32, i32
  }
  func.func @transform_6(%arg0: i32) -> (i32, i32) {
    %c0_i32 = arith.constant 0 : i32
    %c0_i32_0 = arith.constant 0 : i32
    %c0_i32_1 = arith.constant 0 : i32
    return %c0_i32, %c0_i32_0 : i32, i32
  }
  func.func @transform_7(%arg0: i32) -> (i32, i32) {
    %c0_i32 = arith.constant 0 : i32
    %c0_i32_0 = arith.constant 0 : i32
    %c0_i32_1 = arith.constant 0 : i32
    return %c0_i32, %c0_i32_0 : i32, i32
  }
  func.func @transform_8(%arg0: i32) -> (i32, i32) {
    %c0_i32 = arith.constant 0 : i32
    %c0_i32_0 = arith.constant 0 : i32
    return %arg0, %c0_i32 : i32, i32
  }
}

</mosaic_0001>

<llo_original>
// kernel: _cross_attn_forward.1
$region0: #{_cross_attn_forward.1}
  #allocation0 [shape = 'u32[]', space=smem, size = 0x4, offset = 0x4, fixed_abs, tag = 'smem constant byte address 0x4 - core index']
  #allocation1 [shape = 'u32[72,128]{1,0:T(1,128)}', space=vmem, size = 0x9000, scoped, tag = 'internal scratch']
  %s0 = inlined_call_operand.vmem [shape: f32[4,16,32], index: 0, kind: input, shape index: {}]
  %s1 = inlined_call_operand.hbm [shape: f32[4,16,32], index: 1, kind: input, shape index: {}]
  %s2 = inlined_call_operand.hbm [shape: f32[4,16,32], index: 2, kind: input, shape index: {}]
  %s3 = inlined_call_operand.hbm [shape: f32[4,16,32], index: 3, kind: input, shape index: {}]
  %s4 = inlined_call_operand.vmem [shape: f32[16,16], index: 4, kind: input, shape index: {}]
  %s5 = inlined_call_operand.vmem [shape: f32[1,16], index: 5, kind: input, shape index: {}]
  %s6 = inlined_call_operand.vmem [shape: f32[48,16], index: 6, kind: input, shape index: {}]
  %s7 = inlined_call_operand.vmem [shape: f32[48,1], index: 7, kind: input, shape index: {}]
  %s8 = inlined_call_operand.vmem [shape: f32[2,64], index: 8, kind: output, shape index: {}]
  %s9 = sld [smem:[#allocation0]]
  $region54: #{_cross_attn_forward.1} parent=0
    _
  %s11 = ssub.s32 1, %s9
  %s12 = scalar_select 0, %s11, %s9
  $region1: #{_cross_attn_forward.1} parent=0
    #allocation2 [shape = 'u8[32768]{0}', space=vmem, size = 0x8000, scoped, tag = 'input window, operand 1, single buffered']
    #allocation3 [shape = 's32[1]{0}', space=sflag, size = 0x4, scoped, tag = 'scoped memory for _cross_attn_forward.1']
    #allocation4 [shape = 'u8[32768]{0}', space=vmem, size = 0x8000, scoped, tag = 'input window, operand 2, single buffered']
    #allocation5 [shape = 's32[1]{0}', space=sflag, size = 0x4, scoped, tag = 'scoped memory for _cross_attn_forward.1']
    #allocation6 [shape = 'u8[32768]{0}', space=vmem, size = 0x8000, scoped, tag = 'input window, operand 3, single buffered']
    %13 = vsyncpa [#allocation3], 0
    %14 = vsyncpa [#allocation5], 0
    // Predicated region
    $region2: #{_cross_attn_forward.1} parent=1 // pred_check
      _
    $region3: #{_cross_attn_forward.1} parent=1 // pred_check_branch
      %16 = sbr.rel (0) target = $region5
    $region4: #{_cross_attn_forward.1} parent=1 // pred_region
      _
    $region5: #{_cross_attn_forward.1} parent=1 // pred_fallthru
      _
    // Predicated region
    $region6: #{_cross_attn_forward.1} parent=1 // pred_check
      _
    $region7: #{_cross_attn_forward.1} parent=1 // pred_check_branch
      %18 = sbr.rel (0) target = $region9
    $region8: #{_cross_attn_forward.1} parent=1 // pred_region
      %20 = vsyncadd [#allocation3], 0
      %s21 = sshll.u32 %s1, 4
      %s22 = int_to_ptr.hbm [resolvable:$true] %s21
      %s23 = sshll.u32 [#allocation2], 4
      %s24 = int_to_ptr.vmem [resolvable:$true] %s23
      %29 = dma.hbm_to_vmem [thread:$0]  %s22, 1024, %s24, [#allocation3], 128, 128, 8
    $region9: #{_cross_attn_forward.1} parent=1 // pred_fallthru
      _
    // Predicated region
    $region10: #{_cross_attn_forward.1} parent=1 // pred_check
      _
    $region11: #{_cross_attn_forward.1} parent=1 // pred_check_branch
      %31 = sbr.rel (0) target = $region13
    $region12: #{_cross_attn_forward.1} parent=1 // pred_region
      %33 = vsyncadd [#allocation5], 0
      %s34 = sshll.u32 %s2, 4
      %s35 = int_to_ptr.hbm [resolvable:$true] %s34
      %s36 = sshll.u32 [#allocation4], 4
      %s37 = int_to_ptr.vmem [resolvable:$true] %s36
      %42 = dma.hbm_to_vmem [thread:$0]  %s35, 1024, %s37, [#allocation5], 128, 128, 8
    $region13: #{_cross_attn_forward.1} parent=1 // pred_fallthru
      _
    // Predicated region
    $region14: #{_cross_attn_forward.1} parent=1 // pred_check
      _
    $region15: #{_cross_attn_forward.1} parent=1 // pred_check_branch
      %44 = sbr.rel (0) target = $region17
    $region16: #{_cross_attn_forward.1} parent=1 // pred_region
      %46 = vsyncadd [#allocation5], 0
      %s47 = sshll.u32 %s3, 4
      %s48 = int_to_ptr.hbm [resolvable:$true] %s47
      %s49 = sshll.u32 [#allocation6], 4
      %s50 = int_to_ptr.vmem [resolvable:$true] %s49
      %55 = dma.hbm_to_vmem [thread:$0]  %s48, 1024, %s50, [#allocation5], 128, 128, 8
    $region17: #{_cross_attn_forward.1} parent=1 // pred_fallthru
      _
    // Predicated region
    $region18: #{_cross_attn_forward.1} parent=1 // pred_check
      _
    $region19: #{_cross_attn_forward.1} parent=1 // pred_check_branch
      %57 = sbr.rel (0) target = $region21
    $region20: #{_cross_attn_forward.1} parent=1 // pred_region
      _
    $region21: #{_cross_attn_forward.1} parent=1 // pred_fallthru
      _
    // Predicated region
    $region22: #{_cross_attn_forward.1} parent=1 // pred_check
      _
    $region23: #{_cross_attn_forward.1} parent=1 // pred_check_branch
      %59 = sbr.rel (0) target = $region25
    $region24: #{_cross_attn_forward.1} parent=1 // pred_region
      _
    $region25: #{_cross_attn_forward.1} parent=1 // pred_fallthru
      _
    // Predicated region
    $region26: #{_cross_attn_forward.1} parent=1 // pred_check
      _
    $region27: #{_cross_attn_forward.1} parent=1 // pred_check_branch
      %61 = sbr.rel (0) target = $region29
    $region28: #{_cross_attn_forward.1} parent=1 // pred_region
      _
    $region29: #{_cross_attn_forward.1} parent=1 // pred_fallthru
      _
    // Predicated region
    $region30: #{_cross_attn_forward.1} parent=1 // pred_check
      _
    $region31: #{_cross_attn_forward.1} parent=1 // pred_check_branch
      %63 = sbr.rel (0) target = $region33
    $region32: #{_cross_attn_forward.1} parent=1 // pred_region
      _
    $region33: #{_cross_attn_forward.1} parent=1 // pred_fallthru
      _
    // Predicated region
    $region34: #{_cross_attn_forward.1} parent=1 // pred_check
      _
    $region35: #{_cross_attn_forward.1} parent=1 // pred_check_branch
      %65 = sbr.rel (0) target = $region37
    $region36: #{_cross_attn_forward.1} parent=1 // pred_region
      %67 = dma.done [#allocation3], 1024
    $region37: #{_cross_attn_forward.1} parent=1 // pred_fallthru
      _
    // Predicated region
    $region38: #{_cross_attn_forward.1} parent=1 // pred_check
      _
    $region39: #{_cross_attn_forward.1} parent=1 // pred_check_branch
      %69 = sbr.rel (0) target = $region41
    $region40: #{_cross_attn_forward.1} parent=1 // pred_region
      %71 = dma.done [#allocation5], 1024
    $region41: #{_cross_attn_forward.1} parent=1 // pred_fallthru
      _
    // Predicated region
    $region42: #{_cross_attn_forward.1} parent=1 // pred_check
      _
    $region43: #{_cross_attn_forward.1} parent=1 // pred_check_branch
      %73 = sbr.rel (0) target = $region45
    $region44: #{_cross_attn_forward.1} parent=1 // pred_region
      %75 = dma.done [#allocation5], 1024
    $region45: #{_cross_attn_forward.1} parent=1 // pred_fallthru
      _
    %v76 = vld [vmem:[%s4] sm:$0xff]
    %v77 = vld [vmem:[%s4 + $0x8] sm:$0xff]
    %v78 = vld [vmem:[%s5] sm:$0x1]
    %v79 = vld [vmem:[%s6] sm:$0xff]
    %v80 = vld [vmem:[%s6 + $0x8] sm:$0xff]
    %v81 = vld [vmem:[%s6 + $0x10] sm:$0xff]
    %v82 = vld [vmem:[%s6 + $0x18] sm:$0xff]
    %v83 = vld [vmem:[%s6 + $0x20] sm:$0xff]
    %v84 = vld [vmem:[%s6 + $0x28] sm:$0xff]
    %v85 = vld [vmem:[%s7] sm:$0xff]
    %v86 = vld [vmem:[%s7 + $0x8] sm:$0xff]
    %v87 = vld [vmem:[%s7 + $0x10] sm:$0xff]
    %v88 = vld [vmem:[%s7 + $0x18] sm:$0xff]
    %v89 = vld [vmem:[%s7 + $0x20] sm:$0xff]
    %v90 = vld [vmem:[%s7 + $0x28] sm:$0xff]
    %v91 = vld [vmem:[#allocation2] sm:$0xff]
    %v92 = vld [vmem:[#allocation2 + $0x8] sm:$0xff]
    %v93 = vld [vmem:[#allocation2 + $0x10] sm:$0xff]
    %v94 = vld [vmem:[#allocation2 + $0x18] sm:$0xff]
    %v95 = vld [vmem:[#allocation2 + $0x20] sm:$0xff]
    %v96 = vld [vmem:[#allocation2 + $0x28] sm:$0xff]
    %v97 = vld [vmem:[#allocation2 + $0x30] sm:$0xff]
    %v98 = vld [vmem:[#allocation2 + $0x38] sm:$0xff]
    %v99 = vld [vmem:[#allocation4] sm:$0xff]
    %v100 = vld [vmem:[#allocation4 + $0x8] sm:$0xff]
    %v101 = vld [vmem:[#allocation4 + $0x10] sm:$0xff]
    %v102 = vld [vmem:[#allocation4 + $0x18] sm:$0xff]
    %v103 = vld [vmem:[#allocation4 + $0x20] sm:$0xff]
    %v104 = vld [vmem:[#allocation4 + $0x28] sm:$0xff]
    %v105 = vld [vmem:[#allocation4 + $0x30] sm:$0xff]
    %v106 = vld [vmem:[#allocation4 + $0x38] sm:$0xff]
    %107 = vxpose.xlu0.b32.start [1/16] %v91, 128
    %108 = vxpose.xlu0.b32.cont [2/16] %v92, 128
    %109 = vxpose.xlu0.b32.cont [3/16] 0.0, 128
    %110 = vxpose.xlu0.b32.cont [4/16] 0.0, 128
    %111 = vxpose.xlu0.b32.cont [5/16] 0.0, 128
    %112 = vxpose.xlu0.b32.cont [6/16] 0.0, 128
    %113 = vxpose.xlu0.b32.cont [7/16] 0.0, 128
    %114 = vxpose.xlu0.b32.cont [8/16] 0.0, 128
    %115 = vxpose.xlu0.b32.cont [9/16] 0.0, 128
    %116 = vxpose.xlu0.b32.cont [10/16] 0.0, 128
    %117 = vxpose.xlu0.b32.cont [11/16] 0.0, 128
    %118 = vxpose.xlu0.b32.cont [12/16] 0.0, 128
    %119 = vxpose.xlu0.b32.cont [13/16] 0.0, 128
    %120 = vxpose.xlu0.b32.cont [14/16] 0.0, 128
    %121 = vxpose.xlu0.b32.cont [15/16] 0.0, 128
    %122 = vxpose.xlu0.b32.end [16/16] 0.0, 128
    %v123 = vpop.trf.xlu0
    %v124 = vpop.trf.xlu0
    %v125 = vpop.trf.xlu0
    %v126 = vpop.trf.xlu0
    %v127 = vpop.trf.xlu0
    %v128 = vpop.trf.xlu0
    %v129 = vpop.trf.xlu0
    %v130 = vpop.trf.xlu0
    %v131 = vpop.trf.xlu0
    %v132 = vpop.trf.xlu0
    %v133 = vpop.trf.xlu0
    %v134 = vpop.trf.xlu0
    %v135 = vpop.trf.xlu0
    %v136 = vpop.trf.xlu0
    %v137 = vpop.trf.xlu0
    %v138 = vpop.trf.xlu0
    %139 = vxpose.xlu0.b32.start [1/16] %v93, 128
    %140 = vxpose.xlu0.b32.cont [2/16] %v94, 128
    %141 = vxpose.xlu0.b32.cont [3/16] 0.0, 128
    %142 = vxpose.xlu0.b32.cont [4/16] 0.0, 128
    %143 = vxpose.xlu0.b32.cont [5/16] 0.0, 128
    %144 = vxpose.xlu0.b32.cont [6/16] 0.0, 128
    %145 = vxpose.xlu0.b32.cont [7/16] 0.0, 128
    %146 = vxpose.xlu0.b32.cont [8/16] 0.0, 128
    %147 = vxpose.xlu0.b32.cont [9/16] 0.0, 128
    %148 = vxpose.xlu0.b32.cont [10/16] 0.0, 128
    %149 = vxpose.xlu0.b32.cont [11/16] 0.0, 128
    %150 = vxpose.xlu0.b32.cont [12/16] 0.0, 128
    %151 = vxpose.xlu0.b32.cont [13/16] 0.0, 128
    %152 = vxpose.xlu0.b32.cont [14/16] 0.0, 128
    %153 = vxpose.xlu0.b32.cont [15/16] 0.0, 128
    %154 = vxpose.xlu0.b32.end [16/16] 0.0, 128
    %v155 = vpop.trf.xlu0
    %v156 = vpop.trf.xlu0
    %v157 = vpop.trf.xlu0
    %v158 = vpop.trf.xlu0
    %v159 = vpop.trf.xlu0
    %v160 = vpop.trf.xlu0
    %v161 = vpop.trf.xlu0
    %v162 = vpop.trf.xlu0
    %v163 = vpop.trf.xlu0
    %v164 = vpop.trf.xlu0
    %v165 = vpop.trf.xlu0
    %v166 = vpop.trf.xlu0
    %v167 = vpop.trf.xlu0
    %v168 = vpop.trf.xlu0
    %v169 = vpop.trf.xlu0
    %v170 = vpop.trf.xlu0
    %171 = vxpose.xlu0.b32.start [1/16] %v95, 128
    %172 = vxpose.xlu0.b32.cont [2/16] %v96, 128
    %173 = vxpose.xlu0.b32.cont [3/16] 0.0, 128
    %174 = vxpose.xlu0.b32.cont [4/16] 0.0, 128
    %175 = vxpose.xlu0.b32.cont [5/16] 0.0, 128
    %176 = vxpose.xlu0.b32.cont [6/16] 0.0, 128
    %177 = vxpose.xlu0.b32.cont [7/16] 0.0, 128
    %178 = vxpose.xlu0.b32.cont [8/16] 0.0, 128
    %179 = vxpose.xlu0.b32.cont [9/16] 0.0, 128
    %180 = vxpose.xlu0.b32.cont [10/16] 0.0, 128
    %181 = vxpose.xlu0.b32.cont [11/16] 0.0, 128
    %182 = vxpose.xlu0.b32.cont [12/16] 0.0, 128
    %183 = vxpose.xlu0.b32.cont [13/16] 0.0, 128
    %184 = vxpose.xlu0.b32.cont [14/16] 0.0, 128
    %185 = vxpose.xlu0.b32.cont [15/16] 0.0, 128
    %186 = vxpose.xlu0.b32.end [16/16] 0.0, 128
    %v187 = vpop.trf.xlu0
    %v188 = vpop.trf.xlu0
    %v189 = vpop.trf.xlu0
    %v190 = vpop.trf.xlu0
    %v191 = vpop.trf.xlu0
    %v192 = vpop.trf.xlu0
    %v193 = vpop.trf.xlu0
    %v194 = vpop.trf.xlu0
    %v195 = vpop.trf.xlu0
    %v196 = vpop.trf.xlu0
    %v197 = vpop.trf.xlu0
    %v198 = vpop.trf.xlu0
    %v199 = vpop.trf.xlu0
    %v200 = vpop.trf.xlu0
    %v201 = vpop.trf.xlu0
    %v202 = vpop.trf.xlu0
    %203 = vxpose.xlu0.b32.start [1/16] %v97, 128
    %204 = vxpose.xlu0.b32.cont [2/16] %v98, 128
    %205 = vxpose.xlu0.b32.cont [3/16] 0.0, 128
    %206 = vxpose.xlu0.b32.cont [4/16] 0.0, 128
    %207 = vxpose.xlu0.b32.cont [5/16] 0.0, 128
    %208 = vxpose.xlu0.b32.cont [6/16] 0.0, 128
    %209 = vxpose.xlu0.b32.cont [7/16] 0.0, 128
    %210 = vxpose.xlu0.b32.cont [8/16] 0.0, 128
    %211 = vxpose.xlu0.b32.cont [9/16] 0.0, 128
    %212 = vxpose.xlu0.b32.cont [10/16] 0.0, 128
    %213 = vxpose.xlu0.b32.cont [11/16] 0.0, 128
    %214 = vxpose.xlu0.b32.cont [12/16] 0.0, 128
    %215 = vxpose.xlu0.b32.cont [13/16] 0.0, 128
    %216 = vxpose.xlu0.b32.cont [14/16] 0.0, 128
    %217 = vxpose.xlu0.b32.cont [15/16] 0.0, 128
    %218 = vxpose.xlu0.b32.end [16/16] 0.0, 128
    %v219 = vpop.trf.xlu0
    %v220 = vpop.trf.xlu0
    %v221 = vpop.trf.xlu0
    %v222 = vpop.trf.xlu0
    %v223 = vpop.trf.xlu0
    %v224 = vpop.trf.xlu0
    %v225 = vpop.trf.xlu0
    %v226 = vpop.trf.xlu0
    %v227 = vpop.trf.xlu0
    %v228 = vpop.trf.xlu0
    %v229 = vpop.trf.xlu0
    %v230 = vpop.trf.xlu0
    %v231 = vpop.trf.xlu0
    %v232 = vpop.trf.xlu0
    %v233 = vpop.trf.xlu0
    %v234 = vpop.trf.xlu0
    %v236 = vperm.slane %v78, 0
    %vm238 = vcmask 130048
    %v240 = vsel %vm238, %v123, 0
    %v243 = vsel %vm238, %v124, 0
    %v246 = vsel %vm238, %v125, 0
    %v249 = vsel %vm238, %v126, 0
    %v252 = vsel %vm238, %v155, 0
    %v255 = vsel %vm238, %v156, 0
    %v258 = vsel %vm238, %v157, 0
    %v261 = vsel %vm238, %v158, 0
    %v264 = vsel %vm238, %v187, 0
    %v267 = vsel %vm238, %v188, 0
    %v270 = vsel %vm238, %v189, 0
    %v273 = vsel %vm238, %v190, 0
    %v276 = vsel %vm238, %v219, 0
    %v279 = vsel %vm238, %v220, 0
    %v282 = vsel %vm238, %v221, 0
    %v285 = vsel %vm238, %v222, 0
    %287 = vmatpush.msra.mxu0 0.0
    %288 = vmatpush.msra.mxu0 0.0
    %289 = vmatpush.msra.mxu0 0.0
    %290 = vmatpush.msra.mxu0 0.0
    %291 = vmatpush.msra.mxu0 0.0
    %292 = vmatpush.msra.mxu0 0.0
    %293 = vmatpush.msra.mxu0 0.0
    %294 = vmatpush.msra.mxu0 0.0
    %295 = vmatpush.msra.mxu0 0.0
    %296 = vmatpush.msra.mxu0 0.0
    %297 = vmatpush.msra.mxu0 0.0
    %298 = vmatpush.msra.mxu0 0.0
    %299 = vmatpush.msra.mxu0 0.0
    %300 = vmatpush.msra.mxu0 0.0
    %301 = vmatpush.msra.mxu0 %v77
    %302 = vmatpush.msra.mxu0 %v76
    %303 = vmatmul.f32.gmra.mxu0 %v240
    %v304 = vpop.f32.mrf.mxu0
    %v305 = vadd.f32 %v236, %v304
    %306 = vmatmul.f32.gmra.mxu0 %v243
    %v307 = vpop.f32.mrf.mxu0
    %v308 = vadd.f32 %v236, %v307
    %309 = vmatmul.f32.gmra.mxu0 %v246
    %v310 = vpop.f32.mrf.mxu0
    %v311 = vadd.f32 %v236, %v310
    %312 = vmatmul.f32.gmra.mxu0 %v249
    %v313 = vpop.f32.mrf.mxu0
    %v314 = vadd.f32 %v236, %v313
    %315 = vmatmul.f32.gmra.mxu0 %v252
    %v316 = vpop.f32.mrf.mxu0
    %v317 = vadd.f32 %v236, %v316
    %318 = vmatmul.f32.gmra.mxu0 %v255
    %v319 = vpop.f32.mrf.mxu0
    %v320 = vadd.f32 %v236, %v319
    %321 = vmatmul.f32.gmra.mxu0 %v258
    %v322 = vpop.f32.mrf.mxu0
    %v323 = vadd.f32 %v236, %v322
    %324 = vmatmul.f32.gmra.mxu0 %v261
    %v325 = vpop.f32.mrf.mxu0
    %v326 = vadd.f32 %v236, %v325
    %327 = vmatmul.f32.gmra.mxu0 %v264
    %v328 = vpop.f32.mrf.mxu0
    %v329 = vadd.f32 %v236, %v328
    %330 = vmatmul.f32.gmra.mxu0 %v267
    %v331 = vpop.f32.mrf.mxu0
    %v332 = vadd.f32 %v236, %v331
    %333 = vmatmul.f32.gmra.mxu0 %v270
    %v334 = vpop.f32.mrf.mxu0
    %v335 = vadd.f32 %v236, %v334
    %336 = vmatmul.f32.gmra.mxu0 %v273
    %v337 = vpop.f32.mrf.mxu0
    %v338 = vadd.f32 %v236, %v337
    %339 = vmatmul.f32.gmra.mxu0 %v276
    %v340 = vpop.f32.mrf.mxu0
    %v341 = vadd.f32 %v236, %v340
    %342 = vmatmul.f32.gmra.mxu0 %v279
    %v343 = vpop.f32.mrf.mxu0
    %v344 = vadd.f32 %v236, %v343
    %345 = vmatmul.f32.gmra.mxu0 %v282
    %v346 = vpop.f32.mrf.mxu0
    %v347 = vadd.f32 %v236, %v346
    %348 = vmatmul.f32.gmra.mxu0 %v285
    %v349 = vpop.f32.mrf.mxu0
    %v350 = vadd.f32 %v236, %v349
    %351 = vdwg.mxu0
    %353 = vset.pattern.permute.xlu0 0
    %354 = vperm.xlu0 %353, %v85
    %v355 = vpop.permute.xlu0 %354
    %358 = vset.pattern.permute.xlu0 0
    %359 = vperm.xlu0 %358, %v86
    %v360 = vpop.permute.xlu0 %359
    %363 = vset.pattern.permute.xlu0 0
    %364 = vperm.xlu0 %363, %v87
    %v365 = vpop.permute.xlu0 %364
    %368 = vset.pattern.permute.xlu0 0
    %369 = vperm.xlu0 %368, %v88
    %v370 = vpop.permute.xlu0 %369
    %373 = vset.pattern.permute.xlu0 0
    %374 = vperm.xlu0 %373, %v89
    %v375 = vpop.permute.xlu0 %374
    %378 = vset.pattern.permute.xlu0 0
    %379 = vperm.xlu0 %378, %v90
    %v380 = vpop.permute.xlu0 %379
    %v383 = vsel %vm238, %v79, 0
    %v386 = vsel %vm238, %v80, 0
    %v389 = vsel %vm238, %v81, 0
    %v392 = vsel %vm238, %v82, 0
    %v395 = vsel %vm238, %v83, 0
    %v398 = vsel %vm238, %v84, 0
    %400 = vmatpush.msra.mxu0 0.0
    %401 = vmatpush.msra.mxu0 0.0
    %402 = vmatpush.msra.mxu0 0.0
    %403 = vmatpush.msra.mxu0 0.0
    %404 = vmatpush.msra.mxu0 0.0
    %405 = vmatpush.msra.mxu0 0.0
    %406 = vmatpush.msra.mxu0 0.0
    %407 = vmatpush.msra.mxu0 0.0
    %408 = vmatpush.msra.mxu0 0.0
    %409 = vmatpush.msra.mxu0 0.0
    %410 = vmatpush.msra.mxu0 0.0
    %411 = vmatpush.msra.mxu0 0.0
    %412 = vmatpush.msra.mxu0 0.0
    %413 = vmatpush.msra.mxu0 0.0
    %414 = vmatpush.msra.mxu0 %v100
    %415 = vmatpush.msra.mxu0 %v99
    %416 = vmatmul.f32.gmra.mxu0 %v383
    %v417 = vpop.f32.mrf.mxu0
    %v418 = vadd.f32 %v355, %v417
    %419 = vmatmul.f32.gmra.mxu0 %v386
    %v420 = vpop.f32.mrf.mxu0
    %v421 = vadd.f32 %v360, %v420
    %422 = vmatmul.f32.gmra.mxu0 %v389
    %v423 = vpop.f32.mrf.mxu0
    %v424 = vadd.f32 %v365, %v423
    %425 = vmatmul.f32.gmra.mxu0 %v392
    %v426 = vpop.f32.mrf.mxu0
    %v427 = vadd.f32 %v370, %v426
    %428 = vmatmul.f32.gmra.mxu0 %v395
    %v429 = vpop.f32.mrf.mxu0
    %v430 = vadd.f32 %v375, %v429
    %431 = vmatmul.f32.gmra.mxu0 %v398
    %v432 = vpop.f32.mrf.mxu0
    %v433 = vadd.f32 %v380, %v432
    %434 = vdwg.mxu0
    %435 = vmatpush.msra.mxu0 0.0
    %436 = vmatpush.msra.mxu0 0.0
    %437 = vmatpush.msra.mxu0 0.0
    %438 = vmatpush.msra.mxu0 0.0
    %439 = vmatpush.msra.mxu0 0.0
    %440 = vmatpush.msra.mxu0 0.0
    %441 = vmatpush.msra.mxu0 0.0
    %442 = vmatpush.msra.mxu0 0.0
    %443 = vmatpush.msra.mxu0 0.0
    %444 = vmatpush.msra.mxu0 0.0
    %445 = vmatpush.msra.mxu0 0.0
    %446 = vmatpush.msra.mxu0 0.0
    %447 = vmatpush.msra.mxu0 0.0
    %448 = vmatpush.msra.mxu0 0.0
    %449 = vmatpush.msra.mxu0 %v102
    %450 = vmatpush.msra.mxu0 %v101
    %451 = vmatmul.f32.gmra.mxu0 %v383
    %v452 = vpop.f32.mrf.mxu0
    %v453 = vadd.f32 %v355, %v452
    %454 = vmatmul.f32.gmra.mxu0 %v386
    %v455 = vpop.f32.mrf.mxu0
    %v456 = vadd.f32 %v360, %v455
    %457 = vmatmul.f32.gmra.mxu0 %v389
    %v458 = vpop.f32.mrf.mxu0
    %v459 = vadd.f32 %v365, %v458
    %460 = vmatmul.f32.gmra.mxu0 %v392
    %v461 = vpop.f32.mrf.mxu0
    %v462 = vadd.f32 %v370, %v461
    %463 = vmatmul.f32.gmra.mxu0 %v395
    %v464 = vpop.f32.mrf.mxu0
    %v465 = vadd.f32 %v375, %v464
    %466 = vmatmul.f32.gmra.mxu0 %v398
    %v467 = vpop.f32.mrf.mxu0
    %v468 = vadd.f32 %v380, %v467
    %469 = vdwg.mxu0
    %470 = vmatpush.msra.mxu0 0.0
    %471 = vmatpush.msra.mxu0 0.0
    %472 = vmatpush.msra.mxu0 0.0
    %473 = vmatpush.msra.mxu0 0.0
    %474 = vmatpush.msra.mxu0 0.0
    %475 = vmatpush.msra.mxu0 0.0
    %476 = vmatpush.msra.mxu0 0.0
    %477 = vmatpush.msra.mxu0 0.0
    %478 = vmatpush.msra.mxu0 0.0
    %479 = vmatpush.msra.mxu0 0.0
    %480 = vmatpush.msra.mxu0 0.0
    %481 = vmatpush.msra.mxu0 0.0
    %482 = vmatpush.msra.mxu0 0.0
    %483 = vmatpush.msra.mxu0 0.0
    %484 = vmatpush.msra.mxu0 %v104
    %485 = vmatpush.msra.mxu0 %v103
    %486 = vmatmul.f32.gmra.mxu0 %v383
    %v487 = vpop.f32.mrf.mxu0
    %v488 = vadd.f32 %v355, %v487
    %489 = vmatmul.f32.gmra.mxu0 %v386
    %v490 = vpop.f32.mrf.mxu0
    %v491 = vadd.f32 %v360, %v490
    %492 = vmatmul.f32.gmra.mxu0 %v389
    %v493 = vpop.f32.mrf.mxu0
    %v494 = vadd.f32 %v365, %v493
    %495 = vmatmul.f32.gmra.mxu0 %v392
    %v496 = vpop.f32.mrf.mxu0
    %v497 = vadd.f32 %v370, %v496
    %498 = vmatmul.f32.gmra.mxu0 %v395
    %v499 = vpop.f32.mrf.mxu0
    %v500 = vadd.f32 %v375, %v499
    %501 = vmatmul.f32.gmra.mxu0 %v398
    %v502 = vpop.f32.mrf.mxu0
    %v503 = vadd.f32 %v380, %v502
    %504 = vdwg.mxu0
    %505 = vmatpush.msra.mxu0 0.0
    %506 = vmatpush.msra.mxu0 0.0
    %507 = vmatpush.msra.mxu0 0.0
    %508 = vmatpush.msra.mxu0 0.0
    %509 = vmatpush.msra.mxu0 0.0
    %510 = vmatpush.msra.mxu0 0.0
    %511 = vmatpush.msra.mxu0 0.0
    %512 = vmatpush.msra.mxu0 0.0
    %513 = vmatpush.msra.mxu0 0.0
    %514 = vmatpush.msra.mxu0 0.0
    %515 = vmatpush.msra.mxu0 0.0
    %516 = vmatpush.msra.mxu0 0.0
    %517 = vmatpush.msra.mxu0 0.0
    %518 = vmatpush.msra.mxu0 0.0
    %519 = vmatpush.msra.mxu0 %v106
    %520 = vmatpush.msra.mxu0 %v105
    %521 = vmatmul.f32.gmra.mxu0 %v383
    %v522 = vpop.f32.mrf.mxu0
    %v523 = vadd.f32 %v355, %v522
    %524 = vmatmul.f32.gmra.mxu0 %v386
    %v525 = vpop.f32.mrf.mxu0
    %v526 = vadd.f32 %v360, %v525
    %527 = vmatmul.f32.gmra.mxu0 %v389
    %v528 = vpop.f32.mrf.mxu0
    %v529 = vadd.f32 %v365, %v528
    %530 = vmatmul.f32.gmra.mxu0 %v392
    %v531 = vpop.f32.mrf.mxu0
    %v532 = vadd.f32 %v370, %v531
    %533 = vmatmul.f32.gmra.mxu0 %v395
    %v534 = vpop.f32.mrf.mxu0
    %v535 = vadd.f32 %v375, %v534
    %536 = vmatmul.f32.gmra.mxu0 %v398
    %v537 = vpop.f32.mrf.mxu0
    %v538 = vadd.f32 %v380, %v537
    %539 = vdwg.mxu0
    %v541 = vsel %vm238, %v305, 0
    %v544 = vsel %vm238, %v308, 0
    %v547 = vsel %vm238, %v311, 0
    %v550 = vsel %vm238, %v314, 0
    %552 = vmatpush.msra.mxu0 0.0
    %553 = vmatpush.msra.mxu0 0.0
    %554 = vmatpush.msra.mxu0 0.0
    %555 = vmatpush.msra.mxu0 0.0
    %556 = vmatpush.msra.mxu0 0.0
    %557 = vmatpush.msra.mxu0 0.0
    %558 = vmatpush.msra.mxu0 0.0
    %559 = vmatpush.msra.mxu0 0.0
    %560 = vmatpush.msra.mxu0 0.0
    %561 = vmatpush.msra.mxu0 0.0
    %562 = vmatpush.msra.mxu0 0.0
    %563 = vmatpush.msra.mxu0 0.0
    %564 = vmatpush.msra.mxu0 0.0
    %565 = vmatpush.msra.mxu0 0.0
    %566 = vmatpush.msra.mxu0 %v421
    %567 = vmatpush.msra.mxu0 %v418
    %568 = vmatmul.f32.gmra.mxu0 %v541
    %v569 = vpop.f32.mrf.mxu0
    %v570 = vadd.f32 0.0, %v569
    %571 = vmatmul.f32.gmra.mxu0 %v544
    %v572 = vpop.f32.mrf.mxu0
    %v573 = vadd.f32 0.0, %v572
    %574 = vmatmul.f32.gmra.mxu0 %v547
    %v575 = vpop.f32.mrf.mxu0
    %v576 = vadd.f32 0.0, %v575
    %577 = vmatmul.f32.gmra.mxu0 %v550
    %v578 = vpop.f32.mrf.mxu0
    %v579 = vadd.f32 0.0, %v578
    %580 = vdwg.mxu0
    %v582 = vsel %vm238, %v317, 0
    %v585 = vsel %vm238, %v320, 0
    %v588 = vsel %vm238, %v323, 0
    %v591 = vsel %vm238, %v326, 0
    %593 = vmatpush.msra.mxu0 0.0
    %594 = vmatpush.msra.mxu0 0.0
    %595 = vmatpush.msra.mxu0 0.0
    %596 = vmatpush.msra.mxu0 0.0
    %597 = vmatpush.msra.mxu0 0.0
    %598 = vmatpush.msra.mxu0 0.0
    %599 = vmatpush.msra.mxu0 0.0
    %600 = vmatpush.msra.mxu0 0.0
    %601 = vmatpush.msra.mxu0 0.0
    %602 = vmatpush.msra.mxu0 0.0
    %603 = vmatpush.msra.mxu0 0.0
    %604 = vmatpush.msra.mxu0 0.0
    %605 = vmatpush.msra.mxu0 0.0
    %606 = vmatpush.msra.mxu0 0.0
    %607 = vmatpush.msra.mxu0 %v456
    %608 = vmatpush.msra.mxu0 %v453
    %609 = vmatmul.f32.gmra.mxu0 %v582
    %v610 = vpop.f32.mrf.mxu0
    %v611 = vadd.f32 0.0, %v610
    %612 = vmatmul.f32.gmra.mxu0 %v585
    %v613 = vpop.f32.mrf.mxu0
    %v614 = vadd.f32 0.0, %v613
    %615 = vmatmul.f32.gmra.mxu0 %v588
    %v616 = vpop.f32.mrf.mxu0
    %v617 = vadd.f32 0.0, %v616
    %618 = vmatmul.f32.gmra.mxu0 %v591
    %v619 = vpop.f32.mrf.mxu0
    %v620 = vadd.f32 0.0, %v619
    %621 = vdwg.mxu0
    %v623 = vsel %vm238, %v329, 0
    %v626 = vsel %vm238, %v332, 0
    %v629 = vsel %vm238, %v335, 0
    %v632 = vsel %vm238, %v338, 0
    %634 = vmatpush.msra.mxu0 0.0
    %635 = vmatpush.msra.mxu0 0.0
    %636 = vmatpush.msra.mxu0 0.0
    %637 = vmatpush.msra.mxu0 0.0
    %638 = vmatpush.msra.mxu0 0.0
    %639 = vmatpush.msra.mxu0 0.0
    %640 = vmatpush.msra.mxu0 0.0
    %641 = vmatpush.msra.mxu0 0.0
    %642 = vmatpush.msra.mxu0 0.0
    %643 = vmatpush.msra.mxu0 0.0
    %644 = vmatpush.msra.mxu0 0.0
    %645 = vmatpush.msra.mxu0 0.0
    %646 = vmatpush.msra.mxu0 0.0
    %647 = vmatpush.msra.mxu0 0.0
    %648 = vmatpush.msra.mxu0 %v491
    %649 = vmatpush.msra.mxu0 %v488
    %650 = vmatmul.f32.gmra.mxu0 %v623
    %v651 = vpop.f32.mrf.mxu0
    %v652 = vadd.f32 0.0, %v651
    %653 = vmatmul.f32.gmra.mxu0 %v626
    %v654 = vpop.f32.mrf.mxu0
    %v655 = vadd.f32 0.0, %v654
    %656 = vmatmul.f32.gmra.mxu0 %v629
    %v657 = vpop.f32.mrf.mxu0
    %v658 = vadd.f32 0.0, %v657
    %659 = vmatmul.f32.gmra.mxu0 %v632
    %v660 = vpop.f32.mrf.mxu0
    %v661 = vadd.f32 0.0, %v660
    %662 = vdwg.mxu0
    %v664 = vsel %vm238, %v341, 0
    %v667 = vsel %vm238, %v344, 0
    %v670 = vsel %vm238, %v347, 0
    %v673 = vsel %vm238, %v350, 0
    %675 = vmatpush.msra.mxu0 0.0
    %676 = vmatpush.msra.mxu0 0.0
    %677 = vmatpush.msra.mxu0 0.0
    %678 = vmatpush.msra.mxu0 0.0
    %679 = vmatpush.msra.mxu0 0.0
    %680 = vmatpush.msra.mxu0 0.0
    %681 = vmatpush.msra.mxu0 0.0
    %682 = vmatpush.msra.mxu0 0.0
    %683 = vmatpush.msra.mxu0 0.0
    %684 = vmatpush.msra.mxu0 0.0
    %685 = vmatpush.msra.mxu0 0.0
    %686 = vmatpush.msra.mxu0 0.0
    %687 = vmatpush.msra.mxu0 0.0
    %688 = vmatpush.msra.mxu0 0.0
    %689 = vmatpush.msra.mxu0 %v526
    %690 = vmatpush.msra.mxu0 %v523
    %691 = vmatmul.f32.gmra.mxu0 %v664
    %v692 = vpop.f32.mrf.mxu0
    %v693 = vadd.f32 0.0, %v692
    %694 = vmatmul.f32.gmra.mxu0 %v667
    %v695 = vpop.f32.mrf.mxu0
    %v696 = vadd.f32 0.0, %v695
    %697 = vmatmul.f32.gmra.mxu0 %v670
    %v698 = vpop.f32.mrf.mxu0
    %v699 = vadd.f32 0.0, %v698
    %700 = vmatmul.f32.gmra.mxu0 %v673
    %v701 = vpop.f32.mrf.mxu0
    %v702 = vadd.f32 0.0, %v701
    %703 = vdwg.mxu0
    %vm704 = vcmask 261120
    %v705 = vsel %vm704, %v570, -inf
    %706 = vmax.xlane.f32.xlu0 %v705
    %v707 = vpop.xlane.xlu0 %706
    %v708 = vsel %vm704, %v573, -inf
    %709 = vmax.xlane.f32.xlu0 %v708
    %v710 = vpop.xlane.xlu0 %709
    %v711 = vsel %vm704, %v576, -inf
    %712 = vmax.xlane.f32.xlu0 %v711
    %v713 = vpop.xlane.xlu0 %712
    %v714 = vsel %vm704, %v579, -inf
    %715 = vmax.xlane.f32.xlu0 %v714
    %v716 = vpop.xlane.xlu0 %715
    %v717 = vsel %vm704, %v611, -inf
    %718 = vmax.xlane.f32.xlu0 %v717
    %v719 = vpop.xlane.xlu0 %718
    %v720 = vsel %vm704, %v614, -inf
    %721 = vmax.xlane.f32.xlu0 %v720
    %v722 = vpop.xlane.xlu0 %721
    %v723 = vsel %vm704, %v617, -inf
    %724 = vmax.xlane.f32.xlu0 %v723
    %v725 = vpop.xlane.xlu0 %724
    %v726 = vsel %vm704, %v620, -inf
    %727 = vmax.xlane.f32.xlu0 %v726
    %v728 = vpop.xlane.xlu0 %727
    %v729 = vsel %vm704, %v652, -inf
    %730 = vmax.xlane.f32.xlu0 %v729
    %v731 = vpop.xlane.xlu0 %730
    %v732 = vsel %vm704, %v655, -inf
    %733 = vmax.xlane.f32.xlu0 %v732
    %v734 = vpop.xlane.xlu0 %733
    %v735 = vsel %vm704, %v658, -inf
    %736 = vmax.xlane.f32.xlu0 %v735
    %v737 = vpop.xlane.xlu0 %736
    %v738 = vsel %vm704, %v661, -inf
    %739 = vmax.xlane.f32.xlu0 %v738
    %v740 = vpop.xlane.xlu0 %739
    %v741 = vsel %vm704, %v693, -inf
    %742 = vmax.xlane.f32.xlu0 %v741
    %v743 = vpop.xlane.xlu0 %742
    %v744 = vsel %vm704, %v696, -inf
    %745 = vmax.xlane.f32.xlu0 %v744
    %v746 = vpop.xlane.xlu0 %745
    %v747 = vsel %vm704, %v699, -inf
    %748 = vmax.xlane.f32.xlu0 %v747
    %v749 = vpop.xlane.xlu0 %748
    %v750 = vsel %vm704, %v702, -inf
    %751 = vmax.xlane.f32.xlu0 %v750
    %v752 = vpop.xlane.xlu0 %751
    %v753 = vsub.f32 %v570, %v707
    %v754 = vsub.f32 %v573, %v710
    %v755 = vsub.f32 %v576, %v713
    %v756 = vsub.f32 %v579, %v716
    %v757 = vsub.f32 %v611, %v719
    %v758 = vsub.f32 %v614, %v722
    %v759 = vsub.f32 %v617, %v725
    %v760 = vsub.f32 %v620, %v728
    %v761 = vsub.f32 %v652, %v731
    %v762 = vsub.f32 %v655, %v734
    %v763 = vsub.f32 %v658, %v737
    %v764 = vsub.f32 %v661, %v740
    %v765 = vsub.f32 %v693, %v743
    %v766 = vsub.f32 %v696, %v746
    %v767 = vsub.f32 %v699, %v749
    %v768 = vsub.f32 %v702, %v752
    %v769 = vmul.f32 %v753, 1.442695
    %v770 = vpow.pop %v769
    %v771 = vmul.f32 %v754, 1.442695
    %v772 = vpow.pop %v771
    %v773 = vmul.f32 %v755, 1.442695
    %v774 = vpow.pop %v773
    %v775 = vmul.f32 %v756, 1.442695
    %v776 = vpow.pop %v775
    %v777 = vmul.f32 %v757, 1.442695
    %v778 = vpow.pop %v777
    %v779 = vmul.f32 %v758, 1.442695
    %v780 = vpow.pop %v779
    %v781 = vmul.f32 %v759, 1.442695
    %v782 = vpow.pop %v781
    %v783 = vmul.f32 %v760, 1.442695
    %v784 = vpow.pop %v783
    %v785 = vmul.f32 %v761, 1.442695
    %v786 = vpow.pop %v785
    %v787 = vmul.f32 %v762, 1.442695
    %v788 = vpow.pop %v787
    %v789 = vmul.f32 %v763, 1.442695
    %v790 = vpow.pop %v789
    %v791 = vmul.f32 %v764, 1.442695
    %v792 = vpow.pop %v791
    %v793 = vmul.f32 %v765, 1.442695
    %v794 = vpow.pop %v793
    %v795 = vmul.f32 %v766, 1.442695
    %v796 = vpow.pop %v795
    %v797 = vmul.f32 %v767, 1.442695
    %v798 = vpow.pop %v797
    %v799 = vmul.f32 %v768, 1.442695
    %v800 = vpow.pop %v799
    %v801 = vsel %vm704, %v770, 0.0
    %802 = vadd.xlane.f32.xlu0 %v801
    %v803 = vpop.xlane.xlu0 %802
    %v804 = vsel %vm704, %v772, 0.0
    %805 = vadd.xlane.f32.xlu0 %v804
    %v806 = vpop.xlane.xlu0 %805
    %v807 = vsel %vm704, %v774, 0.0
    %808 = vadd.xlane.f32.xlu0 %v807
    %v809 = vpop.xlane.xlu0 %808
    %v810 = vsel %vm704, %v776, 0.0
    %811 = vadd.xlane.f32.xlu0 %v810
    %v812 = vpop.xlane.xlu0 %811
    %v813 = vsel %vm704, %v778, 0.0
    %814 = vadd.xlane.f32.xlu0 %v813
    %v815 = vpop.xlane.xlu0 %814
    %v816 = vsel %vm704, %v780, 0.0
    %817 = vadd.xlane.f32.xlu0 %v816
    %v818 = vpop.xlane.xlu0 %817
    %v819 = vsel %vm704, %v782, 0.0
    %820 = vadd.xlane.f32.xlu0 %v819
    %v821 = vpop.xlane.xlu0 %820
    %v822 = vsel %vm704, %v784, 0.0
    %823 = vadd.xlane.f32.xlu0 %v822
    %v824 = vpop.xlane.xlu0 %823
    %v825 = vsel %vm704, %v786, 0.0
    %826 = vadd.xlane.f32.xlu0 %v825
    %v827 = vpop.xlane.xlu0 %826
    %v828 = vsel %vm704, %v788, 0.0
    %829 = vadd.xlane.f32.xlu0 %v828
    %v830 = vpop.xlane.xlu0 %829
    %v831 = vsel %vm704, %v790, 0.0
    %832 = vadd.xlane.f32.xlu0 %v831
    %v833 = vpop.xlane.xlu0 %832
    %v834 = vsel %vm704, %v792, 0.0
    %835 = vadd.xlane.f32.xlu0 %v834
    %v836 = vpop.xlane.xlu0 %835
    %v837 = vsel %vm704, %v794, 0.0
    %838 = vadd.xlane.f32.xlu0 %v837
    %v839 = vpop.xlane.xlu0 %838
    %v840 = vsel %vm704, %v796, 0.0
    %841 = vadd.xlane.f32.xlu0 %v840
    %v842 = vpop.xlane.xlu0 %841
    %v843 = vsel %vm704, %v798, 0.0
    %844 = vadd.xlane.f32.xlu0 %v843
    %v845 = vpop.xlane.xlu0 %844
    %v846 = vsel %vm704, %v800, 0.0
    %847 = vadd.xlane.f32.xlu0 %v846
    %v848 = vpop.xlane.xlu0 %847
    %v849 = vmul.f32 %v803, 64.0
    %v850 = vmul.f32 %v806, 64.0
    %v851 = vmul.f32 %v809, 64.0
    %v852 = vmul.f32 %v812, 64.0
    %v853 = vmul.f32 %v815, 64.0
    %v854 = vmul.f32 %v818, 64.0
    %v855 = vmul.f32 %v821, 64.0
    %v856 = vmul.f32 %v824, 64.0
    %v857 = vmul.f32 %v827, 64.0
    %v858 = vmul.f32 %v830, 64.0
    %v859 = vmul.f32 %v833, 64.0
    %v860 = vmul.f32 %v836, 64.0
    %v861 = vmul.f32 %v839, 64.0
    %v862 = vmul.f32 %v842, 64.0
    %v863 = vmul.f32 %v845, 64.0
    %v864 = vmul.f32 %v848, 64.0
    %v865 = vrcp.pop %v849
    %v866 = vmul.f32 %v849, %v865
    %v867 = vsub.f32 1.0, %v866
    %v868 = vmul.f32 %v865, %v867
    %v869 = vadd.f32 %v865, %v868
    %vm870 = vweird.f32 %v849
    %vm871 = vweird.f32 %v865
    %vm872 = vmor %vm870, %vm871
    %v873 = vsel %vm872, %v865, %v869
    %v874 = vand.u32 2147483647, %v849
    %vm875 = vcmp.eq.f32.partialorder %v874, 8.507059e+37
    %v876 = vand.u32 %v849, 2147483648
    %v877 = vor.u32 1.1754944e-38, %v876
    %v878 = vsel %vm875, %v877, %v873
    %v879 = vrcp.pop %v850
    %v880 = vmul.f32 %v850, %v879
    %v881 = vsub.f32 1.0, %v880
    %v882 = vmul.f32 %v879, %v881
    %v883 = vadd.f32 %v879, %v882
    %vm884 = vweird.f32 %v850
    %vm885 = vweird.f32 %v879
    %vm886 = vmor %vm884, %vm885
    %v887 = vsel %vm886, %v879, %v883
    %v888 = vand.u32 2147483647, %v850
    %vm889 = vcmp.eq.f32.partialorder %v888, 8.507059e+37
    %v890 = vand.u32 %v850, 2147483648
    %v891 = vor.u32 1.1754944e-38, %v890
    %v892 = vsel %vm889, %v891, %v887
    %v893 = vrcp.pop %v851
    %v894 = vmul.f32 %v851, %v893
    %v895 = vsub.f32 1.0, %v894
    %v896 = vmul.f32 %v893, %v895
    %v897 = vadd.f32 %v893, %v896
    %vm898 = vweird.f32 %v851
    %vm899 = vweird.f32 %v893
    %vm900 = vmor %vm898, %vm899
    %v901 = vsel %vm900, %v893, %v897
    %v902 = vand.u32 2147483647, %v851
    %vm903 = vcmp.eq.f32.partialorder %v902, 8.507059e+37
    %v904 = vand.u32 %v851, 2147483648
    %v905 = vor.u32 1.1754944e-38, %v904
    %v906 = vsel %vm903, %v905, %v901
    %v907 = vrcp.pop %v852
    %v908 = vmul.f32 %v852, %v907
    %v909 = vsub.f32 1.0, %v908
    %v910 = vmul.f32 %v907, %v909
    %v911 = vadd.f32 %v907, %v910
    %vm912 = vweird.f32 %v852
    %vm913 = vweird.f32 %v907
    %vm914 = vmor %vm912, %vm913
    %v915 = vsel %vm914, %v907, %v911
    %v916 = vand.u32 2147483647, %v852
    %vm917 = vcmp.eq.f32.partialorder %v916, 8.507059e+37
    %v918 = vand.u32 %v852, 2147483648
    %v919 = vor.u32 1.1754944e-38, %v918
    %v920 = vsel %vm917, %v919, %v915
    %v921 = vrcp.pop %v853
    %v922 = vmul.f32 %v853, %v921
    %v923 = vsub.f32 1.0, %v922
    %v924 = vmul.f32 %v921, %v923
    %v925 = vadd.f32 %v921, %v924
    %vm926 = vweird.f32 %v853
    %vm927 = vweird.f32 %v921
    %vm928 = vmor %vm926, %vm927
    %v929 = vsel %vm928, %v921, %v925
    %v930 = vand.u32 2147483647, %v853
    %vm931 = vcmp.eq.f32.partialorder %v930, 8.507059e+37
    %v932 = vand.u32 %v853, 2147483648
    %v933 = vor.u32 1.1754944e-38, %v932
    %v934 = vsel %vm931, %v933, %v929
    %v935 = vrcp.pop %v854
    %v936 = vmul.f32 %v854, %v935
    %v937 = vsub.f32 1.0, %v936
    %v938 = vmul.f32 %v935, %v937
    %v939 = vadd.f32 %v935, %v938
    %vm940 = vweird.f32 %v854
    %vm941 = vweird.f32 %v935
    %vm942 = vmor %vm940, %vm941
    %v943 = vsel %vm942, %v935, %v939
    %v944 = vand.u32 2147483647, %v854
    %vm945 = vcmp.eq.f32.partialorder %v944, 8.507059e+37
    %v946 = vand.u32 %v854, 2147483648
    %v947 = vor.u32 1.1754944e-38, %v946
    %v948 = vsel %vm945, %v947, %v943
    %v949 = vrcp.pop %v855
    %v950 = vmul.f32 %v855, %v949
    %v951 = vsub.f32 1.0, %v950
    %v952 = vmul.f32 %v949, %v951
    %v953 = vadd.f32 %v949, %v952
    %vm954 = vweird.f32 %v855
    %vm955 = vweird.f32 %v949
    %vm956 = vmor %vm954, %vm955
    %v957 = vsel %vm956, %v949, %v953
    %v958 = vand.u32 2147483647, %v855
    %vm959 = vcmp.eq.f32.partialorder %v958, 8.507059e+37
    %v960 = vand.u32 %v855, 2147483648
    %v961 = vor.u32 1.1754944e-38, %v960
    %v962 = vsel %vm959, %v961, %v957
    %v963 = vrcp.pop %v856
    %v964 = vmul.f32 %v856, %v963
    %v965 = vsub.f32 1.0, %v964
    %v966 = vmul.f32 %v963, %v965
    %v967 = vadd.f32 %v963, %v966
    %vm968 = vweird.f32 %v856
    %vm969 = vweird.f32 %v963
    %vm970 = vmor %vm968, %vm969
    %v971 = vsel %vm970, %v963, %v967
    %v972 = vand.u32 2147483647, %v856
    %vm973 = vcmp.eq.f32.partialorder %v972, 8.507059e+37
    %v974 = vand.u32 %v856, 2147483648
    %v975 = vor.u32 1.1754944e-38, %v974
    %v976 = vsel %vm973, %v975, %v971
    %v977 = vrcp.pop %v857
    %v978 = vmul.f32 %v857, %v977
    %v979 = vsub.f32 1.0, %v978
    %v980 = vmul.f32 %v977, %v979
    %v981 = vadd.f32 %v977, %v980
    %vm982 = vweird.f32 %v857
    %vm983 = vweird.f32 %v977
    %vm984 = vmor %vm982, %vm983
    %v985 = vsel %vm984, %v977, %v981
    %v986 = vand.u32 2147483647, %v857
    %vm987 = vcmp.eq.f32.partialorder %v986, 8.507059e+37
    %v988 = vand.u32 %v857, 2147483648
    %v989 = vor.u32 1.1754944e-38, %v988
    %v990 = vsel %vm987, %v989, %v985
    %v991 = vrcp.pop %v858
    %v992 = vmul.f32 %v858, %v991
    %v993 = vsub.f32 1.0, %v992
    %v994 = vmul.f32 %v991, %v993
    %v995 = vadd.f32 %v991, %v994
    %vm996 = vweird.f32 %v858
    %vm997 = vweird.f32 %v991
    %vm998 = vmor %vm996, %vm997
    %v999 = vsel %vm998, %v991, %v995
    %v1000 = vand.u32 2147483647, %v858
    %vm1001 = vcmp.eq.f32.partialorder %v1000, 8.507059e+37
    %v1002 = vand.u32 %v858, 2147483648
    %v1003 = vor.u32 1.1754944e-38, %v1002
    %v1004 = vsel %vm1001, %v1003, %v999
    %v1005 = vrcp.pop %v859
    %v1006 = vmul.f32 %v859, %v1005
    %v1007 = vsub.f32 1.0, %v1006
    %v1008 = vmul.f32 %v1005, %v1007
    %v1009 = vadd.f32 %v1005, %v1008
    %vm1010 = vweird.f32 %v859
    %vm1011 = vweird.f32 %v1005
    %vm1012 = vmor %vm1010, %vm1011
    %v1013 = vsel %vm1012, %v1005, %v1009
    %v1014 = vand.u32 2147483647, %v859
    %vm1015 = vcmp.eq.f32.partialorder %v1014, 8.507059e+37
    %v1016 = vand.u32 %v859, 2147483648
    %v1017 = vor.u32 1.1754944e-38, %v1016
    %v1018 = vsel %vm1015, %v1017, %v1013
    %v1019 = vrcp.pop %v860
    %v1020 = vmul.f32 %v860, %v1019
    %v1021 = vsub.f32 1.0, %v1020
    %v1022 = vmul.f32 %v1019, %v1021
    %v1023 = vadd.f32 %v1019, %v1022
    %vm1024 = vweird.f32 %v860
    %vm1025 = vweird.f32 %v1019
    %vm1026 = vmor %vm1024, %vm1025
    %v1027 = vsel %vm1026, %v1019, %v1023
    %v1028 = vand.u32 2147483647, %v860
    %vm1029 = vcmp.eq.f32.partialorder %v1028, 8.507059e+37
    %v1030 = vand.u32 %v860, 2147483648
    %v1031 = vor.u32 1.1754944e-38, %v1030
    %v1032 = vsel %vm1029, %v1031, %v1027
    %v1033 = vrcp.pop %v861
    %v1034 = vmul.f32 %v861, %v1033
    %v1035 = vsub.f32 1.0, %v1034
    %v1036 = vmul.f32 %v1033, %v1035
    %v1037 = vadd.f32 %v1033, %v1036
    %vm1038 = vweird.f32 %v861
    %vm1039 = vweird.f32 %v1033
    %vm1040 = vmor %vm1038, %vm1039
    %v1041 = vsel %vm1040, %v1033, %v1037
    %v1042 = vand.u32 2147483647, %v861
    %vm1043 = vcmp.eq.f32.partialorder %v1042, 8.507059e+37
    %v1044 = vand.u32 %v861, 2147483648
    %v1045 = vor.u32 1.1754944e-38, %v1044
    %v1046 = vsel %vm1043, %v1045, %v1041
    %v1047 = vrcp.pop %v862
    %v1048 = vmul.f32 %v862, %v1047
    %v1049 = vsub.f32 1.0, %v1048
    %v1050 = vmul.f32 %v1047, %v1049
    %v1051 = vadd.f32 %v1047, %v1050
    %vm1052 = vweird.f32 %v862
    %vm1053 = vweird.f32 %v1047
    %vm1054 = vmor %vm1052, %vm1053
    %v1055 = vsel %vm1054, %v1047, %v1051
    %v1056 = vand.u32 2147483647, %v862
    %vm1057 = vcmp.eq.f32.partialorder %v1056, 8.507059e+37
    %v1058 = vand.u32 %v862, 2147483648
    %v1059 = vor.u32 1.1754944e-38, %v1058
    %v1060 = vsel %vm1057, %v1059, %v1055
    %v1061 = vrcp.pop %v863
    %v1062 = vmul.f32 %v863, %v1061
    %v1063 = vsub.f32 1.0, %v1062
    %v1064 = vmul.f32 %v1061, %v1063
    %v1065 = vadd.f32 %v1061, %v1064
    %vm1066 = vweird.f32 %v863
    %vm1067 = vweird.f32 %v1061
    %vm1068 = vmor %vm1066, %vm1067
    %v1069 = vsel %vm1068, %v1061, %v1065
    %v1070 = vand.u32 2147483647, %v863
    %vm1071 = vcmp.eq.f32.partialorder %v1070, 8.507059e+37
    %v1072 = vand.u32 %v863, 2147483648
    %v1073 = vor.u32 1.1754944e-38, %v1072
    %v1074 = vsel %vm1071, %v1073, %v1069
    %v1075 = vrcp.pop %v864
    %v1076 = vmul.f32 %v864, %v1075
    %v1077 = vsub.f32 1.0, %v1076
    %v1078 = vmul.f32 %v1075, %v1077
    %v1079 = vadd.f32 %v1075, %v1078
    %vm1080 = vweird.f32 %v864
    %vm1081 = vweird.f32 %v1075
    %vm1082 = vmor %vm1080, %vm1081
    %v1083 = vsel %vm1082, %v1075, %v1079
    %v1084 = vand.u32 2147483647, %v864
    %vm1085 = vcmp.eq.f32.partialorder %v1084, 8.507059e+37
    %v1086 = vand.u32 %v864, 2147483648
    %v1087 = vor.u32 1.1754944e-38, %v1086
    %v1088 = vsel %vm1085, %v1087, %v1083
    %v1093 = vlaneseq
    %v1094 = vand.u32 %v1093, 127
    %v1095 = vperm.slane %v878, %v1094
    %v1096 = vadd.s32 %v1094, 4294967288
    %v1097 = vperm.slane %v892, %v1096
    %vm1098 = vcmask 130112
    %v1099 = vsel %vm1098, %v1097, %v1095
    %v1100 = vadd.s32 %v1094, 4294967280
    %v1101 = vperm.slane %v906, %v1100
    %vm1102 = vcmask 195712
    %v1103 = vsel %vm1102, %v1101, %v1099
    %v1104 = vadd.s32 %v1094, 4294967272
    %v1105 = vperm.slane %v920, %v1104
    %vm1106 = vcmask 261312
    %v1107 = vsel %vm1106, %v1105, %v1103
    %v1108 = vsel %vm704, %v1107, 0
    %1110 = vmatpush.msra.mxu0 0.0
    %1111 = vmatpush.msra.mxu0 0.0
    %1112 = vmatpush.msra.mxu0 0.0
    %1113 = vmatpush.msra.mxu0 0.0
    %1114 = vmatpush.msra.mxu0 0.0
    %1115 = vmatpush.msra.mxu0 0.0
    %1116 = vmatpush.msra.mxu0 0.0
    %1117 = vmatpush.msra.mxu0 0.0
    %1118 = vmatpush.msra.mxu0 0.0
    %1119 = vmatpush.msra.mxu0 0.0
    %1120 = vmatpush.msra.mxu0 0.0
    %1121 = vmatpush.msra.mxu0 0.0
    %1122 = vmatpush.msra.mxu0 %v776
    %1123 = vmatpush.msra.mxu0 %v774
    %1124 = vmatpush.msra.mxu0 %v772
    %1125 = vmatpush.msra.mxu0 %v770
    %1126 = vmatmul.f32.gmra.mxu0 %v1108
    %v1127 = vpop.f32.mrf.mxu0
    %v1128 = vadd.f32 0.0, %v1127
    %1129 = vdwg.mxu0
    %v1134 = vperm.slane %v934, %v1094
    %v1135 = vperm.slane %v948, %v1096
    %v1136 = vsel %vm1098, %v1135, %v1134
    %v1137 = vperm.slane %v962, %v1100
    %v1138 = vsel %vm1102, %v1137, %v1136
    %v1139 = vperm.slane %v976, %v1104
    %v1140 = vsel %vm1106, %v1139, %v1138
    %v1141 = vsel %vm704, %v1140, 0
    %1143 = vmatpush.msra.mxu0 0.0
    %1144 = vmatpush.msra.mxu0 0.0
    %1145 = vmatpush.msra.mxu0 0.0
    %1146 = vmatpush.msra.mxu0 0.0
    %1147 = vmatpush.msra.mxu0 0.0
    %1148 = vmatpush.msra.mxu0 0.0
    %1149 = vmatpush.msra.mxu0 0.0
    %1150 = vmatpush.msra.mxu0 0.0
    %1151 = vmatpush.msra.mxu0 0.0
    %1152 = vmatpush.msra.mxu0 0.0
    %1153 = vmatpush.msra.mxu0 0.0
    %1154 = vmatpush.msra.mxu0 0.0
    %1155 = vmatpush.msra.mxu0 %v784
    %1156 = vmatpush.msra.mxu0 %v782
    %1157 = vmatpush.msra.mxu0 %v780
    %1158 = vmatpush.msra.mxu0 %v778
    %1159 = vmatmul.f32.gmra.mxu0 %v1141
    %v1160 = vpop.f32.mrf.mxu0
    %v1161 = vadd.f32 0.0, %v1160
    %1162 = vdwg.mxu0
    %v1167 = vperm.slane %v990, %v1094
    %v1168 = vperm.slane %v1004, %v1096
    %v1169 = vsel %vm1098, %v1168, %v1167
    %v1170 = vperm.slane %v1018, %v1100
    %v1171 = vsel %vm1102, %v1170, %v1169
    %v1172 = vperm.slane %v1032, %v1104
    %v1173 = vsel %vm1106, %v1172, %v1171
    %v1174 = vsel %vm704, %v1173, 0
    %1176 = vmatpush.msra.mxu0 0.0
    %1177 = vmatpush.msra.mxu0 0.0
    %1178 = vmatpush.msra.mxu0 0.0
    %1179 = vmatpush.msra.mxu0 0.0
    %1180 = vmatpush.msra.mxu0 0.0
    %1181 = vmatpush.msra.mxu0 0.0
    %1182 = vmatpush.msra.mxu0 0.0
    %1183 = vmatpush.msra.mxu0 0.0
    %1184 = vmatpush.msra.mxu0 0.0
    %1185 = vmatpush.msra.mxu0 0.0
    %1186 = vmatpush.msra.mxu0 0.0
    %1187 = vmatpush.msra.mxu0 0.0
    %1188 = vmatpush.msra.mxu0 %v792
    %1189 = vmatpush.msra.mxu0 %v790
    %1190 = vmatpush.msra.mxu0 %v788
    %1191 = vmatpush.msra.mxu0 %v786
    %1192 = vmatmul.f32.gmra.mxu0 %v1174
    %v1193 = vpop.f32.mrf.mxu0
    %v1194 = vadd.f32 0.0, %v1193
    %1195 = vdwg.mxu0
    %v1200 = vperm.slane %v1046, %v1094
    %v1201 = vperm.slane %v1060, %v1096
    %v1202 = vsel %vm1098, %v1201, %v1200
    %v1203 = vperm.slane %v1074, %v1100
    %v1204 = vsel %vm1102, %v1203, %v1202
    %v1205 = vperm.slane %v1088, %v1104
    %v1206 = vsel %vm1106, %v1205, %v1204
    %v1207 = vsel %vm704, %v1206, 0
    %1209 = vmatpush.msra.mxu0 0.0
    %1210 = vmatpush.msra.mxu0 0.0
    %1211 = vmatpush.msra.mxu0 0.0
    %1212 = vmatpush.msra.mxu0 0.0
    %1213 = vmatpush.msra.mxu0 0.0
    %1214 = vmatpush.msra.mxu0 0.0
    %1215 = vmatpush.msra.mxu0 0.0
    %1216 = vmatpush.msra.mxu0 0.0
    %1217 = vmatpush.msra.mxu0 0.0
    %1218 = vmatpush.msra.mxu0 0.0
    %1219 = vmatpush.msra.mxu0 0.0
    %1220 = vmatpush.msra.mxu0 0.0
    %1221 = vmatpush.msra.mxu0 %v800
    %1222 = vmatpush.msra.mxu0 %v798
    %1223 = vmatpush.msra.mxu0 %v796
    %1224 = vmatpush.msra.mxu0 %v794
    %1225 = vmatmul.f32.gmra.mxu0 %v1207
    %v1226 = vpop.f32.mrf.mxu0
    %v1227 = vadd.f32 0.0, %v1226
    %1228 = vdwg.mxu0
    %v1230 = vsel %vm704, %v1128, 0
    %v1233 = vsel %vm704, %v424, 0
    %v1236 = vsel %vm704, %v427, 0
    %v1239 = vsel %vm704, %v430, 0
    %v1242 = vsel %vm704, %v433, 0
    %1244 = vmatpush.xpose.msra.mxu0 0.0
    %1245 = vmatpush.xpose.msra.mxu0 0.0
    %1246 = vmatpush.xpose.msra.mxu0 0.0
    %1247 = vmatpush.xpose.msra.mxu0 0.0
    %1248 = vmatpush.xpose.msra.mxu0 0.0
    %1249 = vmatpush.xpose.msra.mxu0 0.0
    %1250 = vmatpush.xpose.msra.mxu0 0.0
    %1251 = vmatpush.xpose.msra.mxu0 0.0
    %1252 = vmatpush.xpose.msra.mxu0 0.0
    %1253 = vmatpush.xpose.msra.mxu0 0.0
    %1254 = vmatpush.xpose.msra.mxu0 0.0
    %1255 = vmatpush.xpose.msra.mxu0 0.0
    %1256 = vmatpush.xpose.msra.mxu0 %v1242
    %1257 = vmatpush.xpose.msra.mxu0 %v1239
    %1258 = vmatpush.xpose.msra.mxu0 %v1236
    %1259 = vmatpush.xpose.msra.mxu0 %v1233
    %1260 = vmatmul.f32.gmra.mxu0 %v1230
    %v1261 = vpop.f32.mrf.mxu0
    %v1262 = vadd.f32 0.0, %v1261
    %1263 = vdwg.mxu0
    %v1265 = vsel %vm704, %v1161, 0
    %v1268 = vsel %vm704, %v459, 0
    %v1271 = vsel %vm704, %v462, 0
    %v1274 = vsel %vm704, %v465, 0
    %v1277 = vsel %vm704, %v468, 0
    %1279 = vmatpush.xpose.msra.mxu0 0.0
    %1280 = vmatpush.xpose.msra.mxu0 0.0
    %1281 = vmatpush.xpose.msra.mxu0 0.0
    %1282 = vmatpush.xpose.msra.mxu0 0.0
    %1283 = vmatpush.xpose.msra.mxu0 0.0
    %1284 = vmatpush.xpose.msra.mxu0 0.0
    %1285 = vmatpush.xpose.msra.mxu0 0.0
    %1286 = vmatpush.xpose.msra.mxu0 0.0
    %1287 = vmatpush.xpose.msra.mxu0 0.0
    %1288 = vmatpush.xpose.msra.mxu0 0.0
    %1289 = vmatpush.xpose.msra.mxu0 0.0
    %1290 = vmatpush.xpose.msra.mxu0 0.0
    %1291 = vmatpush.xpose.msra.mxu0 %v1277
    %1292 = vmatpush.xpose.msra.mxu0 %v1274
    %1293 = vmatpush.xpose.msra.mxu0 %v1271
    %1294 = vmatpush.xpose.msra.mxu0 %v1268
    %1295 = vmatmul.f32.gmra.mxu0 %v1265
    %v1296 = vpop.f32.mrf.mxu0
    %v1297 = vadd.f32 0.0, %v1296
    %1298 = vdwg.mxu0
    %v1300 = vsel %vm704, %v1194, 0
    %v1303 = vsel %vm704, %v494, 0
    %v1306 = vsel %vm704, %v497, 0
    %v1309 = vsel %vm704, %v500, 0
    %v1312 = vsel %vm704, %v503, 0
    %1314 = vmatpush.xpose.msra.mxu0 0.0
    %1315 = vmatpush.xpose.msra.mxu0 0.0
    %1316 = vmatpush.xpose.msra.mxu0 0.0
    %1317 = vmatpush.xpose.msra.mxu0 0.0
    %1318 = vmatpush.xpose.msra.mxu0 0.0
    %1319 = vmatpush.xpose.msra.mxu0 0.0
    %1320 = vmatpush.xpose.msra.mxu0 0.0
    %1321 = vmatpush.xpose.msra.mxu0 0.0
    %1322 = vmatpush.xpose.msra.mxu0 0.0
    %1323 = vmatpush.xpose.msra.mxu0 0.0
    %1324 = vmatpush.xpose.msra.mxu0 0.0
    %1325 = vmatpush.xpose.msra.mxu0 0.0
    %1326 = vmatpush.xpose.msra.mxu0 %v1312
    %1327 = vmatpush.xpose.msra.mxu0 %v1309
    %1328 = vmatpush.xpose.msra.mxu0 %v1306
    %1329 = vmatpush.xpose.msra.mxu0 %v1303
    %1330 = vmatmul.f32.gmra.mxu0 %v1300
    %v1331 = vpop.f32.mrf.mxu0
    %v1332 = vadd.f32 0.0, %v1331
    %1333 = vdwg.mxu0
    %v1335 = vsel %vm704, %v1227, 0
    %v1338 = vsel %vm704, %v529, 0
    %v1341 = vsel %vm704, %v532, 0
    %v1344 = vsel %vm704, %v535, 0
    %v1347 = vsel %vm704, %v538, 0
    %1349 = vmatpush.xpose.msra.mxu0 0.0
    %1350 = vmatpush.xpose.msra.mxu0 0.0
    %1351 = vmatpush.xpose.msra.mxu0 0.0
    %1352 = vmatpush.xpose.msra.mxu0 0.0
    %1353 = vmatpush.xpose.msra.mxu0 0.0
    %1354 = vmatpush.xpose.msra.mxu0 0.0
    %1355 = vmatpush.xpose.msra.mxu0 0.0
    %1356 = vmatpush.xpose.msra.mxu0 0.0
    %1357 = vmatpush.xpose.msra.mxu0 0.0
    %1358 = vmatpush.xpose.msra.mxu0 0.0
    %1359 = vmatpush.xpose.msra.mxu0 0.0
    %1360 = vmatpush.xpose.msra.mxu0 0.0
    %1361 = vmatpush.xpose.msra.mxu0 %v1347
    %1362 = vmatpush.xpose.msra.mxu0 %v1344
    %1363 = vmatpush.xpose.msra.mxu0 %v1341
    %1364 = vmatpush.xpose.msra.mxu0 %v1338
    %1365 = vmatmul.f32.gmra.mxu0 %v1335
    %v1366 = vpop.f32.mrf.mxu0
    %v1367 = vadd.f32 0.0, %v1366
    %1368 = vdwg.mxu0
    %v1373 = vrot.slane %v1297, 7
    %vm1374 = vcmask 1041409
    %v1375 = vsel %vm1374, %v1373, %v1262
    %v1376 = vrot.slane %v1367, 7
    %v1377 = vsel %vm1374, %v1376, %v1332
    %vm1380 = vcmask 254976
    %v1381 = vsel %vm1380, %v1375, 0.0
    %v1382 = vrot.slane %v1381, 4
    %v1383 = vadd.f32 %v1381, %v1382
    %v1384 = vrot.slane %v1383, 2
    %v1385 = vadd.f32 %v1383, %v1384
    %v1386 = vrot.slane %v1385, 1
    %v1387 = vadd.f32 %v1385, %v1386
    %v1388 = vsel %vm1380, %v1377, 0.0
    %v1389 = vrot.slane %v1388, 4
    %v1390 = vadd.f32 %v1388, %v1389
    %v1391 = vrot.slane %v1390, 2
    %v1392 = vadd.f32 %v1390, %v1391
    %v1393 = vrot.slane %v1392, 1
    %v1394 = vadd.f32 %v1392, %v1393
    %v1395 = vld [vmem:[#allocation6] sm:$0xff]
    %v1396 = vld [vmem:[#allocation6 + $0x8] sm:$0xff]
    %v1397 = vld [vmem:[#allocation6 + $0x10] sm:$0xff]
    %v1398 = vld [vmem:[#allocation6 + $0x18] sm:$0xff]
    %v1399 = vld [vmem:[#allocation6 + $0x20] sm:$0xff]
    %v1400 = vld [vmem:[#allocation6 + $0x28] sm:$0xff]
    %v1401 = vld [vmem:[#allocation6 + $0x30] sm:$0xff]
    %v1402 = vld [vmem:[#allocation6 + $0x38] sm:$0xff]
    %v1403 = vld [vmem:[%s0] sm:$0xff]
    %v1404 = vld [vmem:[%s0 + $0x8] sm:$0xff]
    %v1405 = vld [vmem:[%s0 + $0x10] sm:$0xff]
    %v1406 = vld [vmem:[%s0 + $0x18] sm:$0xff]
    %v1407 = vld [vmem:[%s0 + $0x20] sm:$0xff]
    %v1408 = vld [vmem:[%s0 + $0x28] sm:$0xff]
    %v1409 = vld [vmem:[%s0 + $0x30] sm:$0xff]
    %v1410 = vld [vmem:[%s0 + $0x38] sm:$0xff]
    %1411 = vxpose.xlu0.b32.start [1/16] %v1395, 128
    %1412 = vxpose.xlu0.b32.cont [2/16] %v1396, 128
    %1413 = vxpose.xlu0.b32.cont [3/16] 0.0, 128
    %1414 = vxpose.xlu0.b32.cont [4/16] 0.0, 128
    %1415 = vxpose.xlu0.b32.cont [5/16] 0.0, 128
    %1416 = vxpose.xlu0.b32.cont [6/16] 0.0, 128
    %1417 = vxpose.xlu0.b32.cont [7/16] 0.0, 128
    %1418 = vxpose.xlu0.b32.cont [8/16] 0.0, 128
    %1419 = vxpose.xlu0.b32.cont [9/16] 0.0, 128
    %1420 = vxpose.xlu0.b32.cont [10/16] 0.0, 128
    %1421 = vxpose.xlu0.b32.cont [11/16] 0.0, 128
    %1422 = vxpose.xlu0.b32.cont [12/16] 0.0, 128
    %1423 = vxpose.xlu0.b32.cont [13/16] 0.0, 128
    %1424 = vxpose.xlu0.b32.cont [14/16] 0.0, 128
    %1425 = vxpose.xlu0.b32.cont [15/16] 0.0, 128
    %1426 = vxpose.xlu0.b32.end [16/16] 0.0, 128
    %v1427 = vpop.trf.xlu0
    %v1428 = vpop.trf.xlu0
    %v1429 = vpop.trf.xlu0
    %v1430 = vpop.trf.xlu0
    %v1431 = vpop.trf.xlu0
    %v1432 = vpop.trf.xlu0
    %v1433 = vpop.trf.xlu0
    %v1434 = vpop.trf.xlu0
    %v1435 = vpop.trf.xlu0
    %v1436 = vpop.trf.xlu0
    %v1437 = vpop.trf.xlu0
    %v1438 = vpop.trf.xlu0
    %v1439 = vpop.trf.xlu0
    %v1440 = vpop.trf.xlu0
    %v1441 = vpop.trf.xlu0
    %v1442 = vpop.trf.xlu0
    %1443 = vxpose.xlu0.b32.start [1/16] %v1397, 128
    %1444 = vxpose.xlu0.b32.cont [2/16] %v1398, 128
    %1445 = vxpose.xlu0.b32.cont [3/16] 0.0, 128
    %1446 = vxpose.xlu0.b32.cont [4/16] 0.0, 128
    %1447 = vxpose.xlu0.b32.cont [5/16] 0.0, 128
    %1448 = vxpose.xlu0.b32.cont [6/16] 0.0, 128
    %1449 = vxpose.xlu0.b32.cont [7/16] 0.0, 128
    %1450 = vxpose.xlu0.b32.cont [8/16] 0.0, 128
    %1451 = vxpose.xlu0.b32.cont [9/16] 0.0, 128
    %1452 = vxpose.xlu0.b32.cont [10/16] 0.0, 128
    %1453 = vxpose.xlu0.b32.cont [11/16] 0.0, 128
    %1454 = vxpose.xlu0.b32.cont [12/16] 0.0, 128
    %1455 = vxpose.xlu0.b32.cont [13/16] 0.0, 128
    %1456 = vxpose.xlu0.b32.cont [14/16] 0.0, 128
    %1457 = vxpose.xlu0.b32.cont [15/16] 0.0, 128
    %1458 = vxpose.xlu0.b32.end [16/16] 0.0, 128
    %v1459 = vpop.trf.xlu0
    %v1460 = vpop.trf.xlu0
    %v1461 = vpop.trf.xlu0
    %v1462 = vpop.trf.xlu0
    %v1463 = vpop.trf.xlu0
    %v1464 = vpop.trf.xlu0
    %v1465 = vpop.trf.xlu0
    %v1466 = vpop.trf.xlu0
    %v1467 = vpop.trf.xlu0
    %v1468 = vpop.trf.xlu0
    %v1469 = vpop.trf.xlu0
    %v1470 = vpop.trf.xlu0
    %v1471 = vpop.trf.xlu0
    %v1472 = vpop.trf.xlu0
    %v1473 = vpop.trf.xlu0
    %v1474 = vpop.trf.xlu0
    %1475 = vxpose.xlu0.b32.start [1/16] %v1399, 128
    %1476 = vxpose.xlu0.b32.cont [2/16] %v1400, 128
    %1477 = vxpose.xlu0.b32.cont [3/16] 0.0, 128
    %1478 = vxpose.xlu0.b32.cont [4/16] 0.0, 128
    %1479 = vxpose.xlu0.b32.cont [5/16] 0.0, 128
    %1480 = vxpose.xlu0.b32.cont [6/16] 0.0, 128
    %1481 = vxpose.xlu0.b32.cont [7/16] 0.0, 128
    %1482 = vxpose.xlu0.b32.cont [8/16] 0.0, 128
    %1483 = vxpose.xlu0.b32.cont [9/16] 0.0, 128
    %1484 = vxpose.xlu0.b32.cont [10/16] 0.0, 128
    %1485 = vxpose.xlu0.b32.cont [11/16] 0.0, 128
    %1486 = vxpose.xlu0.b32.cont [12/16] 0.0, 128
    %1487 = vxpose.xlu0.b32.cont [13/16] 0.0, 128
    %1488 = vxpose.xlu0.b32.cont [14/16] 0.0, 128
    %1489 = vxpose.xlu0.b32.cont [15/16] 0.0, 128
    %1490 = vxpose.xlu0.b32.end [16/16] 0.0, 128
    %v1491 = vpop.trf.xlu0
    %v1492 = vpop.trf.xlu0
    %v1493 = vpop.trf.xlu0
    %v1494 = vpop.trf.xlu0
    %v1495 = vpop.trf.xlu0
    %v1496 = vpop.trf.xlu0
    %v1497 = vpop.trf.xlu0
    %v1498 = vpop.trf.xlu0
    %v1499 = vpop.trf.xlu0
    %v1500 = vpop.trf.xlu0
    %v1501 = vpop.trf.xlu0
    %v1502 = vpop.trf.xlu0
    %v1503 = vpop.trf.xlu0
    %v1504 = vpop.trf.xlu0
    %v1505 = vpop.trf.xlu0
    %v1506 = vpop.trf.xlu0
    %1507 = vxpose.xlu0.b32.start [1/16] %v1401, 128
    %1508 = vxpose.xlu0.b32.cont [2/16] %v1402, 128
    %1509 = vxpose.xlu0.b32.cont [3/16] 0.0, 128
    %1510 = vxpose.xlu0.b32.cont [4/16] 0.0, 128
    %1511 = vxpose.xlu0.b32.cont [5/16] 0.0, 128
    %1512 = vxpose.xlu0.b32.cont [6/16] 0.0, 128
    %1513 = vxpose.xlu0.b32.cont [7/16] 0.0, 128
    %1514 = vxpose.xlu0.b32.cont [8/16] 0.0, 128
    %1515 = vxpose.xlu0.b32.cont [9/16] 0.0, 128
    %1516 = vxpose.xlu0.b32.cont [10/16] 0.0, 128
    %1517 = vxpose.xlu0.b32.cont [11/16] 0.0, 128
    %1518 = vxpose.xlu0.b32.cont [12/16] 0.0, 128
    %1519 = vxpose.xlu0.b32.cont [13/16] 0.0, 128
    %1520 = vxpose.xlu0.b32.cont [14/16] 0.0, 128
    %1521 = vxpose.xlu0.b32.cont [15/16] 0.0, 128
    %1522 = vxpose.xlu0.b32.end [16/16] 0.0, 128
    %v1523 = vpop.trf.xlu0
    %v1524 = vpop.trf.xlu0
    %v1525 = vpop.trf.xlu0
    %v1526 = vpop.trf.xlu0
    %v1527 = vpop.trf.xlu0
    %v1528 = vpop.trf.xlu0
    %v1529 = vpop.trf.xlu0
    %v1530 = vpop.trf.xlu0
    %v1531 = vpop.trf.xlu0
    %v1532 = vpop.trf.xlu0
    %v1533 = vpop.trf.xlu0
    %v1534 = vpop.trf.xlu0
    %v1535 = vpop.trf.xlu0
    %v1536 = vpop.trf.xlu0
    %v1537 = vpop.trf.xlu0
    %v1538 = vpop.trf.xlu0
    %v1540 = vsel %vm238, %v1427, 0
    %v1543 = vsel %vm238, %v1428, 0
    %v1546 = vsel %vm238, %v1429, 0
    %v1549 = vsel %vm238, %v1430, 0
    %v1552 = vsel %vm238, %v1459, 0
    %v1555 = vsel %vm238, %v1460, 0
    %v1558 = vsel %vm238, %v1461, 0
    %v1561 = vsel %vm238, %v1462, 0
    %v1564 = vsel %vm238, %v1491, 0
    %v1567 = vsel %vm238, %v1492, 0
    %v1570 = vsel %vm238, %v1493, 0
    %v1573 = vsel %vm238, %v1494, 0
    %v1576 = vsel %vm238, %v1523, 0
    %v1579 = vsel %vm238, %v1524, 0
    %v1582 = vsel %vm238, %v1525, 0
    %v1585 = vsel %vm238, %v1526, 0
    %1587 = vmatpush.msra.mxu0 0.0
    %1588 = vmatpush.msra.mxu0 0.0
    %1589 = vmatpush.msra.mxu0 0.0
    %1590 = vmatpush.msra.mxu0 0.0
    %1591 = vmatpush.msra.mxu0 0.0
    %1592 = vmatpush.msra.mxu0 0.0
    %1593 = vmatpush.msra.mxu0 0.0
    %1594 = vmatpush.msra.mxu0 0.0
    %1595 = vmatpush.msra.mxu0 0.0
    %1596 = vmatpush.msra.mxu0 0.0
    %1597 = vmatpush.msra.mxu0 0.0
    %1598 = vmatpush.msra.mxu0 0.0
    %1599 = vmatpush.msra.mxu0 0.0
    %1600 = vmatpush.msra.mxu0 0.0
    %1601 = vmatpush.msra.mxu0 %v77
    %1602 = vmatpush.msra.mxu0 %v76
    %1603 = vmatmul.f32.gmra.mxu0 %v1540
    %v1604 = vpop.f32.mrf.mxu0
    %v1605 = vadd.f32 %v236, %v1604
    %1606 = vmatmul.f32.gmra.mxu0 %v1543
    %v1607 = vpop.f32.mrf.mxu0
    %v1608 = vadd.f32 %v236, %v1607
    %1609 = vmatmul.f32.gmra.mxu0 %v1546
    %v1610 = vpop.f32.mrf.mxu0
    %v1611 = vadd.f32 %v236, %v1610
    %1612 = vmatmul.f32.gmra.mxu0 %v1549
    %v1613 = vpop.f32.mrf.mxu0
    %v1614 = vadd.f32 %v236, %v1613
    %1615 = vmatmul.f32.gmra.mxu0 %v1552
    %v1616 = vpop.f32.mrf.mxu0
    %v1617 = vadd.f32 %v236, %v1616
    %1618 = vmatmul.f32.gmra.mxu0 %v1555
    %v1619 = vpop.f32.mrf.mxu0
    %v1620 = vadd.f32 %v236, %v1619
    %1621 = vmatmul.f32.gmra.mxu0 %v1558
    %v1622 = vpop.f32.mrf.mxu0
    %v1623 = vadd.f32 %v236, %v1622
    %1624 = vmatmul.f32.gmra.mxu0 %v1561
    %v1625 = vpop.f32.mrf.mxu0
    %v1626 = vadd.f32 %v236, %v1625
    %1627 = vmatmul.f32.gmra.mxu0 %v1564
    %v1628 = vpop.f32.mrf.mxu0
    %v1629 = vadd.f32 %v236, %v1628
    %1630 = vmatmul.f32.gmra.mxu0 %v1567
    %v1631 = vpop.f32.mrf.mxu0
    %v1632 = vadd.f32 %v236, %v1631
    %1633 = vmatmul.f32.gmra.mxu0 %v1570
    %v1634 = vpop.f32.mrf.mxu0
    %v1635 = vadd.f32 %v236, %v1634
    %1636 = vmatmul.f32.gmra.mxu0 %v1573
    %v1637 = vpop.f32.mrf.mxu0
    %v1638 = vadd.f32 %v236, %v1637
    %1639 = vmatmul.f32.gmra.mxu0 %v1576
    %v1640 = vpop.f32.mrf.mxu0
    %v1641 = vadd.f32 %v236, %v1640
    %1642 = vmatmul.f32.gmra.mxu0 %v1579
    %v1643 = vpop.f32.mrf.mxu0
    %v1644 = vadd.f32 %v236, %v1643
    %1645 = vmatmul.f32.gmra.mxu0 %v1582
    %v1646 = vpop.f32.mrf.mxu0
    %v1647 = vadd.f32 %v236, %v1646
    %1648 = vmatmul.f32.gmra.mxu0 %v1585
    %v1649 = vpop.f32.mrf.mxu0
    %v1650 = vadd.f32 %v236, %v1649
    %1651 = vdwg.mxu0
    %1652 = vmatpush.msra.mxu0 0.0
    %1653 = vmatpush.msra.mxu0 0.0
    %1654 = vmatpush.msra.mxu0 0.0
    %1655 = vmatpush.msra.mxu0 0.0
    %1656 = vmatpush.msra.mxu0 0.0
    %1657 = vmatpush.msra.mxu0 0.0
    %1658 = vmatpush.msra.mxu0 0.0
    %1659 = vmatpush.msra.mxu0 0.0
    %1660 = vmatpush.msra.mxu0 0.0
    %1661 = vmatpush.msra.mxu0 0.0
    %1662 = vmatpush.msra.mxu0 0.0
    %1663 = vmatpush.msra.mxu0 0.0
    %1664 = vmatpush.msra.mxu0 0.0
    %1665 = vmatpush.msra.mxu0 0.0
    %1666 = vmatpush.msra.mxu0 %v1404
    %1667 = vmatpush.msra.mxu0 %v1403
    %1668 = vmatmul.f32.gmra.mxu0 %v383
    %v1669 = vpop.f32.mrf.mxu0
    %v1670 = vadd.f32 %v355, %v1669
    %1671 = vmatmul.f32.gmra.mxu0 %v386
    %v1672 = vpop.f32.mrf.mxu0
    %v1673 = vadd.f32 %v360, %v1672
    %1674 = vmatmul.f32.gmra.mxu0 %v389
    %v1675 = vpop.f32.mrf.mxu0
    %v1676 = vadd.f32 %v365, %v1675
    %1677 = vmatmul.f32.gmra.mxu0 %v392
    %v1678 = vpop.f32.mrf.mxu0
    %v1679 = vadd.f32 %v370, %v1678
    %1680 = vmatmul.f32.gmra.mxu0 %v395
    %v1681 = vpop.f32.mrf.mxu0
    %v1682 = vadd.f32 %v375, %v1681
    %1683 = vmatmul.f32.gmra.mxu0 %v398
    %v1684 = vpop.f32.mrf.mxu0
    %v1685 = vadd.f32 %v380, %v1684
    %1686 = vdwg.mxu0
    %1687 = vmatpush.msra.mxu0 0.0
    %1688 = vmatpush.msra.mxu0 0.0
    %1689 = vmatpush.msra.mxu0 0.0
    %1690 = vmatpush.msra.mxu0 0.0
    %1691 = vmatpush.msra.mxu0 0.0
    %1692 = vmatpush.msra.mxu0 0.0
    %1693 = vmatpush.msra.mxu0 0.0
    %1694 = vmatpush.msra.mxu0 0.0
    %1695 = vmatpush.msra.mxu0 0.0
    %1696 = vmatpush.msra.mxu0 0.0
    %1697 = vmatpush.msra.mxu0 0.0
    %1698 = vmatpush.msra.mxu0 0.0
    %1699 = vmatpush.msra.mxu0 0.0
    %1700 = vmatpush.msra.mxu0 0.0
    %1701 = vmatpush.msra.mxu0 %v1406
    %1702 = vmatpush.msra.mxu0 %v1405
    %1703 = vmatmul.f32.gmra.mxu0 %v383
    %v1704 = vpop.f32.mrf.mxu0
    %v1705 = vadd.f32 %v355, %v1704
    %1706 = vmatmul.f32.gmra.mxu0 %v386
    %v1707 = vpop.f32.mrf.mxu0
    %v1708 = vadd.f32 %v360, %v1707
    %1709 = vmatmul.f32.gmra.mxu0 %v389
    %v1710 = vpop.f32.mrf.mxu0
    %v1711 = vadd.f32 %v365, %v1710
    %1712 = vmatmul.f32.gmra.mxu0 %v392
    %v1713 = vpop.f32.mrf.mxu0
    %v1714 = vadd.f32 %v370, %v1713
    %1715 = vmatmul.f32.gmra.mxu0 %v395
    %v1716 = vpop.f32.mrf.mxu0
    %v1717 = vadd.f32 %v375, %v1716
    %1718 = vmatmul.f32.gmra.mxu0 %v398
    %v1719 = vpop.f32.mrf.mxu0
    %v1720 = vadd.f32 %v380, %v1719
    %1721 = vdwg.mxu0
    %1722 = vmatpush.msra.mxu0 0.0
    %1723 = vmatpush.msra.mxu0 0.0
    %1724 = vmatpush.msra.mxu0 0.0
    %1725 = vmatpush.msra.mxu0 0.0
    %1726 = vmatpush.msra.mxu0 0.0
    %1727 = vmatpush.msra.mxu0 0.0
    %1728 = vmatpush.msra.mxu0 0.0
    %1729 = vmatpush.msra.mxu0 0.0
    %1730 = vmatpush.msra.mxu0 0.0
    %1731 = vmatpush.msra.mxu0 0.0
    %1732 = vmatpush.msra.mxu0 0.0
    %1733 = vmatpush.msra.mxu0 0.0
    %1734 = vmatpush.msra.mxu0 0.0
    %1735 = vmatpush.msra.mxu0 0.0
    %1736 = vmatpush.msra.mxu0 %v1408
    %1737 = vmatpush.msra.mxu0 %v1407
    %1738 = vmatmul.f32.gmra.mxu0 %v383
    %v1739 = vpop.f32.mrf.mxu0
    %v1740 = vadd.f32 %v355, %v1739
    %1741 = vmatmul.f32.gmra.mxu0 %v386
    %v1742 = vpop.f32.mrf.mxu0
    %v1743 = vadd.f32 %v360, %v1742
    %1744 = vmatmul.f32.gmra.mxu0 %v389
    %v1745 = vpop.f32.mrf.mxu0
    %v1746 = vadd.f32 %v365, %v1745
    %1747 = vmatmul.f32.gmra.mxu0 %v392
    %v1748 = vpop.f32.mrf.mxu0
    %v1749 = vadd.f32 %v370, %v1748
    %1750 = vmatmul.f32.gmra.mxu0 %v395
    %v1751 = vpop.f32.mrf.mxu0
    %v1752 = vadd.f32 %v375, %v1751
    %1753 = vmatmul.f32.gmra.mxu0 %v398
    %v1754 = vpop.f32.mrf.mxu0
    %v1755 = vadd.f32 %v380, %v1754
    %1756 = vdwg.mxu0
    %1757 = vmatpush.msra.mxu0 0.0
    %1758 = vmatpush.msra.mxu0 0.0
    %1759 = vmatpush.msra.mxu0 0.0
    %1760 = vmatpush.msra.mxu0 0.0
    %1761 = vmatpush.msra.mxu0 0.0
    %1762 = vmatpush.msra.mxu0 0.0
    %1763 = vmatpush.msra.mxu0 0.0
    %1764 = vmatpush.msra.mxu0 0.0
    %1765 = vmatpush.msra.mxu0 0.0
    %1766 = vmatpush.msra.mxu0 0.0
    %1767 = vmatpush.msra.mxu0 0.0
    %1768 = vmatpush.msra.mxu0 0.0
    %1769 = vmatpush.msra.mxu0 0.0
    %1770 = vmatpush.msra.mxu0 0.0
    %1771 = vmatpush.msra.mxu0 %v1410
    %1772 = vmatpush.msra.mxu0 %v1409
    %1773 = vmatmul.f32.gmra.mxu0 %v383
    %v1774 = vpop.f32.mrf.mxu0
    %v1775 = vadd.f32 %v355, %v1774
    %1776 = vmatmul.f32.gmra.mxu0 %v386
    %v1777 = vpop.f32.mrf.mxu0
    %v1778 = vadd.f32 %v360, %v1777
    %1779 = vmatmul.f32.gmra.mxu0 %v389
    %v1780 = vpop.f32.mrf.mxu0
    %v1781 = vadd.f32 %v365, %v1780
    %1782 = vmatmul.f32.gmra.mxu0 %v392
    %v1783 = vpop.f32.mrf.mxu0
    %v1784 = vadd.f32 %v370, %v1783
    %1785 = vmatmul.f32.gmra.mxu0 %v395
    %v1786 = vpop.f32.mrf.mxu0
    %v1787 = vadd.f32 %v375, %v1786
    %1788 = vmatmul.f32.gmra.mxu0 %v398
    %v1789 = vpop.f32.mrf.mxu0
    %v1790 = vadd.f32 %v380, %v1789
    %1791 = vdwg.mxu0
    %v1793 = vsel %vm238, %v1605, 0
    %v1796 = vsel %vm238, %v1608, 0
    %v1799 = vsel %vm238, %v1611, 0
    %v1802 = vsel %vm238, %v1614, 0
    %1804 = vmatpush.msra.mxu0 0.0
    %1805 = vmatpush.msra.mxu0 0.0
    %1806 = vmatpush.msra.mxu0 0.0
    %1807 = vmatpush.msra.mxu0 0.0
    %1808 = vmatpush.msra.mxu0 0.0
    %1809 = vmatpush.msra.mxu0 0.0
    %1810 = vmatpush.msra.mxu0 0.0
    %1811 = vmatpush.msra.mxu0 0.0
    %1812 = vmatpush.msra.mxu0 0.0
    %1813 = vmatpush.msra.mxu0 0.0
    %1814 = vmatpush.msra.mxu0 0.0
    %1815 = vmatpush.msra.mxu0 0.0
    %1816 = vmatpush.msra.mxu0 0.0
    %1817 = vmatpush.msra.mxu0 0.0
    %1818 = vmatpush.msra.mxu0 %v1673
    %1819 = vmatpush.msra.mxu0 %v1670
    %1820 = vmatmul.f32.gmra.mxu0 %v1793
    %v1821 = vpop.f32.mrf.mxu0
    %v1822 = vadd.f32 0.0, %v1821
    %1823 = vmatmul.f32.gmra.mxu0 %v1796
    %v1824 = vpop.f32.mrf.mxu0
    %v1825 = vadd.f32 0.0, %v1824
    %1826 = vmatmul.f32.gmra.mxu0 %v1799
    %v1827 = vpop.f32.mrf.mxu0
    %v1828 = vadd.f32 0.0, %v1827
    %1829 = vmatmul.f32.gmra.mxu0 %v1802
    %v1830 = vpop.f32.mrf.mxu0
    %v1831 = vadd.f32 0.0, %v1830
    %1832 = vdwg.mxu0
    %v1834 = vsel %vm238, %v1617, 0
    %v1837 = vsel %vm238, %v1620, 0
    %v1840 = vsel %vm238, %v1623, 0
    %v1843 = vsel %vm238, %v1626, 0
    %1845 = vmatpush.msra.mxu0 0.0
    %1846 = vmatpush.msra.mxu0 0.0
    %1847 = vmatpush.msra.mxu0 0.0
    %1848 = vmatpush.msra.mxu0 0.0
    %1849 = vmatpush.msra.mxu0 0.0
    %1850 = vmatpush.msra.mxu0 0.0
    %1851 = vmatpush.msra.mxu0 0.0
    %1852 = vmatpush.msra.mxu0 0.0
    %1853 = vmatpush.msra.mxu0 0.0
    %1854 = vmatpush.msra.mxu0 0.0
    %1855 = vmatpush.msra.mxu0 0.0
    %1856 = vmatpush.msra.mxu0 0.0
    %1857 = vmatpush.msra.mxu0 0.0
    %1858 = vmatpush.msra.mxu0 0.0
    %1859 = vmatpush.msra.mxu0 %v1708
    %1860 = vmatpush.msra.mxu0 %v1705
    %1861 = vmatmul.f32.gmra.mxu0 %v1834
    %v1862 = vpop.f32.mrf.mxu0
    %v1863 = vadd.f32 0.0, %v1862
    %1864 = vmatmul.f32.gmra.mxu0 %v1837
    %v1865 = vpop.f32.mrf.mxu0
    %v1866 = vadd.f32 0.0, %v1865
    %1867 = vmatmul.f32.gmra.mxu0 %v1840
    %v1868 = vpop.f32.mrf.mxu0
    %v1869 = vadd.f32 0.0, %v1868
    %1870 = vmatmul.f32.gmra.mxu0 %v1843
    %v1871 = vpop.f32.mrf.mxu0
    %v1872 = vadd.f32 0.0, %v1871
    %1873 = vdwg.mxu0
    %v1875 = vsel %vm238, %v1629, 0
    %v1878 = vsel %vm238, %v1632, 0
    %v1881 = vsel %vm238, %v1635, 0
    %v1884 = vsel %vm238, %v1638, 0
    %1886 = vmatpush.msra.mxu0 0.0
    %1887 = vmatpush.msra.mxu0 0.0
    %1888 = vmatpush.msra.mxu0 0.0
    %1889 = vmatpush.msra.mxu0 0.0
    %1890 = vmatpush.msra.mxu0 0.0
    %1891 = vmatpush.msra.mxu0 0.0
    %1892 = vmatpush.msra.mxu0 0.0
    %1893 = vmatpush.msra.mxu0 0.0
    %1894 = vmatpush.msra.mxu0 0.0
    %1895 = vmatpush.msra.mxu0 0.0
    %1896 = vmatpush.msra.mxu0 0.0
    %1897 = vmatpush.msra.mxu0 0.0
    %1898 = vmatpush.msra.mxu0 0.0
    %1899 = vmatpush.msra.mxu0 0.0
    %1900 = vmatpush.msra.mxu0 %v1743
    %1901 = vmatpush.msra.mxu0 %v1740
    %1902 = vmatmul.f32.gmra.mxu0 %v1875
    %v1903 = vpop.f32.mrf.mxu0
    %v1904 = vadd.f32 0.0, %v1903
    %1905 = vmatmul.f32.gmra.mxu0 %v1878
    %v1906 = vpop.f32.mrf.mxu0
    %v1907 = vadd.f32 0.0, %v1906
    %1908 = vmatmul.f32.gmra.mxu0 %v1881
    %v1909 = vpop.f32.mrf.mxu0
    %v1910 = vadd.f32 0.0, %v1909
    %1911 = vmatmul.f32.gmra.mxu0 %v1884
    %v1912 = vpop.f32.mrf.mxu0
    %v1913 = vadd.f32 0.0, %v1912
    %1914 = vdwg.mxu0
    %v1916 = vsel %vm238, %v1641, 0
    %v1919 = vsel %vm238, %v1644, 0
    %v1922 = vsel %vm238, %v1647, 0
    %v1925 = vsel %vm238, %v1650, 0
    %1927 = vmatpush.msra.mxu0 0.0
    %1928 = vmatpush.msra.mxu0 0.0
    %1929 = vmatpush.msra.mxu0 0.0
    %1930 = vmatpush.msra.mxu0 0.0
    %1931 = vmatpush.msra.mxu0 0.0
    %1932 = vmatpush.msra.mxu0 0.0
    %1933 = vmatpush.msra.mxu0 0.0
    %1934 = vmatpush.msra.mxu0 0.0
    %1935 = vmatpush.msra.mxu0 0.0
    %1936 = vmatpush.msra.mxu0 0.0
    %1937 = vmatpush.msra.mxu0 0.0
    %1938 = vmatpush.msra.mxu0 0.0
    %1939 = vmatpush.msra.mxu0 0.0
    %1940 = vmatpush.msra.mxu0 0.0
    %1941 = vmatpush.msra.mxu0 %v1778
    %1942 = vmatpush.msra.mxu0 %v1775
    %1943 = vmatmul.f32.gmra.mxu0 %v1916
    %v1944 = vpop.f32.mrf.mxu0
    %v1945 = vadd.f32 0.0, %v1944
    %1946 = vmatmul.f32.gmra.mxu0 %v1919
    %v1947 = vpop.f32.mrf.mxu0
    %v1948 = vadd.f32 0.0, %v1947
    %1949 = vmatmul.f32.gmra.mxu0 %v1922
    %v1950 = vpop.f32.mrf.mxu0
    %v1951 = vadd.f32 0.0, %v1950
    %1952 = vmatmul.f32.gmra.mxu0 %v1925
    %v1953 = vpop.f32.mrf.mxu0
    %v1954 = vadd.f32 0.0, %v1953
    %1955 = vdwg.mxu0
    %v1956 = vsel %vm704, %v1822, -inf
    %1957 = vmax.xlane.f32.xlu0 %v1956
    %v1958 = vpop.xlane.xlu0 %1957
    %v1959 = vsel %vm704, %v1825, -inf
    %1960 = vmax.xlane.f32.xlu0 %v1959
    %v1961 = vpop.xlane.xlu0 %1960
    %v1962 = vsel %vm704, %v1828, -inf
    %1963 = vmax.xlane.f32.xlu0 %v1962
    %v1964 = vpop.xlane.xlu0 %1963
    %v1965 = vsel %vm704, %v1831, -inf
    %1966 = vmax.xlane.f32.xlu0 %v1965
    %v1967 = vpop.xlane.xlu0 %1966
    %v1968 = vsel %vm704, %v1863, -inf
    %1969 = vmax.xlane.f32.xlu0 %v1968
    %v1970 = vpop.xlane.xlu0 %1969
    %v1971 = vsel %vm704, %v1866, -inf
    %1972 = vmax.xlane.f32.xlu0 %v1971
    %v1973 = vpop.xlane.xlu0 %1972
    %v1974 = vsel %vm704, %v1869, -inf
    %1975 = vmax.xlane.f32.xlu0 %v1974
    %v1976 = vpop.xlane.xlu0 %1975
    %v1977 = vsel %vm704, %v1872, -inf
    %1978 = vmax.xlane.f32.xlu0 %v1977
    %v1979 = vpop.xlane.xlu0 %1978
    %v1980 = vsel %vm704, %v1904, -inf
    %1981 = vmax.xlane.f32.xlu0 %v1980
    %v1982 = vpop.xlane.xlu0 %1981
    %v1983 = vsel %vm704, %v1907, -inf
    %1984 = vmax.xlane.f32.xlu0 %v1983
    %v1985 = vpop.xlane.xlu0 %1984
    %v1986 = vsel %vm704, %v1910, -inf
    %1987 = vmax.xlane.f32.xlu0 %v1986
    %v1988 = vpop.xlane.xlu0 %1987
    %v1989 = vsel %vm704, %v1913, -inf
    %1990 = vmax.xlane.f32.xlu0 %v1989
    %v1991 = vpop.xlane.xlu0 %1990
    %v1992 = vsel %vm704, %v1945, -inf
    %1993 = vmax.xlane.f32.xlu0 %v1992
    %v1994 = vpop.xlane.xlu0 %1993
    %v1995 = vsel %vm704, %v1948, -inf
    %1996 = vmax.xlane.f32.xlu0 %v1995
    %v1997 = vpop.xlane.xlu0 %1996
    %v1998 = vsel %vm704, %v1951, -inf
    %1999 = vmax.xlane.f32.xlu0 %v1998
    %v2000 = vpop.xlane.xlu0 %1999
    %v2001 = vsel %vm704, %v1954, -inf
    %2002 = vmax.xlane.f32.xlu0 %v2001
    %v2003 = vpop.xlane.xlu0 %2002
    %v2004 = vsub.f32 %v1822, %v1958
    %v2005 = vsub.f32 %v1825, %v1961
    %v2006 = vsub.f32 %v1828, %v1964
    %v2007 = vsub.f32 %v1831, %v1967
    %v2008 = vsub.f32 %v1863, %v1970
    %v2009 = vsub.f32 %v1866, %v1973
    %v2010 = vsub.f32 %v1869, %v1976
    %v2011 = vsub.f32 %v1872, %v1979
    %v2012 = vsub.f32 %v1904, %v1982
    %v2013 = vsub.f32 %v1907, %v1985
    %v2014 = vsub.f32 %v1910, %v1988
    %v2015 = vsub.f32 %v1913, %v1991
    %v2016 = vsub.f32 %v1945, %v1994
    %v2017 = vsub.f32 %v1948, %v1997
    %v2018 = vsub.f32 %v1951, %v2000
    %v2019 = vsub.f32 %v1954, %v2003
    %v2020 = vmul.f32 %v2004, 1.442695
    %v2021 = vpow.pop %v2020
    %v2022 = vmul.f32 %v2005, 1.442695
    %v2023 = vpow.pop %v2022
    %v2024 = vmul.f32 %v2006, 1.442695
    %v2025 = vpow.pop %v2024
    %v2026 = vmul.f32 %v2007, 1.442695
    %v2027 = vpow.pop %v2026
    %v2028 = vmul.f32 %v2008, 1.442695
    %v2029 = vpow.pop %v2028
    %v2030 = vmul.f32 %v2009, 1.442695
    %v2031 = vpow.pop %v2030
    %v2032 = vmul.f32 %v2010, 1.442695
    %v2033 = vpow.pop %v2032
    %v2034 = vmul.f32 %v2011, 1.442695
    %v2035 = vpow.pop %v2034
    %v2036 = vmul.f32 %v2012, 1.442695
    %v2037 = vpow.pop %v2036
    %v2038 = vmul.f32 %v2013, 1.442695
    %v2039 = vpow.pop %v2038
    %v2040 = vmul.f32 %v2014, 1.442695
    %v2041 = vpow.pop %v2040
    %v2042 = vmul.f32 %v2015, 1.442695
    %v2043 = vpow.pop %v2042
    %v2044 = vmul.f32 %v2016, 1.442695
    %v2045 = vpow.pop %v2044
    %v2046 = vmul.f32 %v2017, 1.442695
    %v2047 = vpow.pop %v2046
    %v2048 = vmul.f32 %v2018, 1.442695
    %v2049 = vpow.pop %v2048
    %v2050 = vmul.f32 %v2019, 1.442695
    %v2051 = vpow.pop %v2050
    %v2052 = vsel %vm704, %v2021, 0.0
    %2053 = vadd.xlane.f32.xlu0 %v2052
    %v2054 = vpop.xlane.xlu0 %2053
    %v2055 = vsel %vm704, %v2023, 0.0
    %2056 = vadd.xlane.f32.xlu0 %v2055
    %v2057 = vpop.xlane.xlu0 %2056
    %v2058 = vsel %vm704, %v2025, 0.0
    %2059 = vadd.xlane.f32.xlu0 %v2058
    %v2060 = vpop.xlane.xlu0 %2059
    %v2061 = vsel %vm704, %v2027, 0.0
    %2062 = vadd.xlane.f32.xlu0 %v2061
    %v2063 = vpop.xlane.xlu0 %2062
    %v2064 = vsel %vm704, %v2029, 0.0
    %2065 = vadd.xlane.f32.xlu0 %v2064
    %v2066 = vpop.xlane.xlu0 %2065
    %v2067 = vsel %vm704, %v2031, 0.0
    %2068 = vadd.xlane.f32.xlu0 %v2067
    %v2069 = vpop.xlane.xlu0 %2068
    %v2070 = vsel %vm704, %v2033, 0.0
    %2071 = vadd.xlane.f32.xlu0 %v2070
    %v2072 = vpop.xlane.xlu0 %2071
    %v2073 = vsel %vm704, %v2035, 0.0
    %2074 = vadd.xlane.f32.xlu0 %v2073
    %v2075 = vpop.xlane.xlu0 %2074
    %v2076 = vsel %vm704, %v2037, 0.0
    %2077 = vadd.xlane.f32.xlu0 %v2076
    %v2078 = vpop.xlane.xlu0 %2077
    %v2079 = vsel %vm704, %v2039, 0.0
    %2080 = vadd.xlane.f32.xlu0 %v2079
    %v2081 = vpop.xlane.xlu0 %2080
    %v2082 = vsel %vm704, %v2041, 0.0
    %2083 = vadd.xlane.f32.xlu0 %v2082
    %v2084 = vpop.xlane.xlu0 %2083
    %v2085 = vsel %vm704, %v2043, 0.0
    %2086 = vadd.xlane.f32.xlu0 %v2085
    %v2087 = vpop.xlane.xlu0 %2086
    %v2088 = vsel %vm704, %v2045, 0.0
    %2089 = vadd.xlane.f32.xlu0 %v2088
    %v2090 = vpop.xlane.xlu0 %2089
    %v2091 = vsel %vm704, %v2047, 0.0
    %2092 = vadd.xlane.f32.xlu0 %v2091
    %v2093 = vpop.xlane.xlu0 %2092
    %v2094 = vsel %vm704, %v2049, 0.0
    %2095 = vadd.xlane.f32.xlu0 %v2094
    %v2096 = vpop.xlane.xlu0 %2095
    %v2097 = vsel %vm704, %v2051, 0.0
    %2098 = vadd.xlane.f32.xlu0 %v2097
    %v2099 = vpop.xlane.xlu0 %2098
    %v2100 = vmul.f32 %v2054, 64.0
    %v2101 = vmul.f32 %v2057, 64.0
    %v2102 = vmul.f32 %v2060, 64.0
    %v2103 = vmul.f32 %v2063, 64.0
    %v2104 = vmul.f32 %v2066, 64.0
    %v2105 = vmul.f32 %v2069, 64.0
    %v2106 = vmul.f32 %v2072, 64.0
    %v2107 = vmul.f32 %v2075, 64.0
    %v2108 = vmul.f32 %v2078, 64.0
    %v2109 = vmul.f32 %v2081, 64.0
    %v2110 = vmul.f32 %v2084, 64.0
    %v2111 = vmul.f32 %v2087, 64.0
    %v2112 = vmul.f32 %v2090, 64.0
    %v2113 = vmul.f32 %v2093, 64.0
    %v2114 = vmul.f32 %v2096, 64.0
    %v2115 = vmul.f32 %v2099, 64.0
    %v2116 = vrcp.pop %v2100
    %v2117 = vmul.f32 %v2100, %v2116
    %v2118 = vsub.f32 1.0, %v2117
    %v2119 = vmul.f32 %v2116, %v2118
    %v2120 = vadd.f32 %v2116, %v2119
    %vm2121 = vweird.f32 %v2100
    %vm2122 = vweird.f32 %v2116
    %vm2123 = vmor %vm2121, %vm2122
    %v2124 = vsel %vm2123, %v2116, %v2120
    %v2125 = vand.u32 2147483647, %v2100
    %vm2126 = vcmp.eq.f32.partialorder %v2125, 8.507059e+37
    %v2127 = vand.u32 %v2100, 2147483648
    %v2128 = vor.u32 1.1754944e-38, %v2127
    %v2129 = vsel %vm2126, %v2128, %v2124
    %v2130 = vrcp.pop %v2101
    %v2131 = vmul.f32 %v2101, %v2130
    %v2132 = vsub.f32 1.0, %v2131
    %v2133 = vmul.f32 %v2130, %v2132
    %v2134 = vadd.f32 %v2130, %v2133
    %vm2135 = vweird.f32 %v2101
    %vm2136 = vweird.f32 %v2130
    %vm2137 = vmor %vm2135, %vm2136
    %v2138 = vsel %vm2137, %v2130, %v2134
    %v2139 = vand.u32 2147483647, %v2101
    %vm2140 = vcmp.eq.f32.partialorder %v2139, 8.507059e+37
    %v2141 = vand.u32 %v2101, 2147483648
    %v2142 = vor.u32 1.1754944e-38, %v2141
    %v2143 = vsel %vm2140, %v2142, %v2138
    %v2144 = vrcp.pop %v2102
    %v2145 = vmul.f32 %v2102, %v2144
    %v2146 = vsub.f32 1.0, %v2145
    %v2147 = vmul.f32 %v2144, %v2146
    %v2148 = vadd.f32 %v2144, %v2147
    %vm2149 = vweird.f32 %v2102
    %vm2150 = vweird.f32 %v2144
    %vm2151 = vmor %vm2149, %vm2150
    %v2152 = vsel %vm2151, %v2144, %v2148
    %v2153 = vand.u32 2147483647, %v2102
    %vm2154 = vcmp.eq.f32.partialorder %v2153, 8.507059e+37
    %v2155 = vand.u32 %v2102, 2147483648
    %v2156 = vor.u32 1.1754944e-38, %v2155
    %v2157 = vsel %vm2154, %v2156, %v2152
    %v2158 = vrcp.pop %v2103
    %v2159 = vmul.f32 %v2103, %v2158
    %v2160 = vsub.f32 1.0, %v2159
    %v2161 = vmul.f32 %v2158, %v2160
    %v2162 = vadd.f32 %v2158, %v2161
    %vm2163 = vweird.f32 %v2103
    %vm2164 = vweird.f32 %v2158
    %vm2165 = vmor %vm2163, %vm2164
    %v2166 = vsel %vm2165, %v2158, %v2162
    %v2167 = vand.u32 2147483647, %v2103
    %vm2168 = vcmp.eq.f32.partialorder %v2167, 8.507059e+37
    %v2169 = vand.u32 %v2103, 2147483648
    %v2170 = vor.u32 1.1754944e-38, %v2169
    %v2171 = vsel %vm2168, %v2170, %v2166
    %v2172 = vrcp.pop %v2104
    %v2173 = vmul.f32 %v2104, %v2172
    %v2174 = vsub.f32 1.0, %v2173
    %v2175 = vmul.f32 %v2172, %v2174
    %v2176 = vadd.f32 %v2172, %v2175
    %vm2177 = vweird.f32 %v2104
    %vm2178 = vweird.f32 %v2172
    %vm2179 = vmor %vm2177, %vm2178
    %v2180 = vsel %vm2179, %v2172, %v2176
    %v2181 = vand.u32 2147483647, %v2104
    %vm2182 = vcmp.eq.f32.partialorder %v2181, 8.507059e+37
    %v2183 = vand.u32 %v2104, 2147483648
    %v2184 = vor.u32 1.1754944e-38, %v2183
    %v2185 = vsel %vm2182, %v2184, %v2180
    %v2186 = vrcp.pop %v2105
    %v2187 = vmul.f32 %v2105, %v2186
    %v2188 = vsub.f32 1.0, %v2187
    %v2189 = vmul.f32 %v2186, %v2188
    %v2190 = vadd.f32 %v2186, %v2189
    %vm2191 = vweird.f32 %v2105
    %vm2192 = vweird.f32 %v2186
    %vm2193 = vmor %vm2191, %vm2192
    %v2194 = vsel %vm2193, %v2186, %v2190
    %v2195 = vand.u32 2147483647, %v2105
    %vm2196 = vcmp.eq.f32.partialorder %v2195, 8.507059e+37
    %v2197 = vand.u32 %v2105, 2147483648
    %v2198 = vor.u32 1.1754944e-38, %v2197
    %v2199 = vsel %vm2196, %v2198, %v2194
    %v2200 = vrcp.pop %v2106
    %v2201 = vmul.f32 %v2106, %v2200
    %v2202 = vsub.f32 1.0, %v2201
    %v2203 = vmul.f32 %v2200, %v2202
    %v2204 = vadd.f32 %v2200, %v2203
    %vm2205 = vweird.f32 %v2106
    %vm2206 = vweird.f32 %v2200
    %vm2207 = vmor %vm2205, %vm2206
    %v2208 = vsel %vm2207, %v2200, %v2204
    %v2209 = vand.u32 2147483647, %v2106
    %vm2210 = vcmp.eq.f32.partialorder %v2209, 8.507059e+37
    %v2211 = vand.u32 %v2106, 2147483648
    %v2212 = vor.u32 1.1754944e-38, %v2211
    %v2213 = vsel %vm2210, %v2212, %v2208
    %v2214 = vrcp.pop %v2107
    %v2215 = vmul.f32 %v2107, %v2214
    %v2216 = vsub.f32 1.0, %v2215
    %v2217 = vmul.f32 %v2214, %v2216
    %v2218 = vadd.f32 %v2214, %v2217
    %vm2219 = vweird.f32 %v2107
    %vm2220 = vweird.f32 %v2214
    %vm2221 = vmor %vm2219, %vm2220
    %v2222 = vsel %vm2221, %v2214, %v2218
    %v2223 = vand.u32 2147483647, %v2107
    %vm2224 = vcmp.eq.f32.partialorder %v2223, 8.507059e+37
    %v2225 = vand.u32 %v2107, 2147483648
    %v2226 = vor.u32 1.1754944e-38, %v2225
    %v2227 = vsel %vm2224, %v2226, %v2222
    %v2228 = vrcp.pop %v2108
    %v2229 = vmul.f32 %v2108, %v2228
    %v2230 = vsub.f32 1.0, %v2229
    %v2231 = vmul.f32 %v2228, %v2230
    %v2232 = vadd.f32 %v2228, %v2231
    %vm2233 = vweird.f32 %v2108
    %vm2234 = vweird.f32 %v2228
    %vm2235 = vmor %vm2233, %vm2234
    %v2236 = vsel %vm2235, %v2228, %v2232
    %v2237 = vand.u32 2147483647, %v2108
    %vm2238 = vcmp.eq.f32.partialorder %v2237, 8.507059e+37
    %v2239 = vand.u32 %v2108, 2147483648
    %v2240 = vor.u32 1.1754944e-38, %v2239
    %v2241 = vsel %vm2238, %v2240, %v2236
    %v2242 = vrcp.pop %v2109
    %v2243 = vmul.f32 %v2109, %v2242
    %v2244 = vsub.f32 1.0, %v2243
    %v2245 = vmul.f32 %v2242, %v2244
    %v2246 = vadd.f32 %v2242, %v2245
    %vm2247 = vweird.f32 %v2109
    %vm2248 = vweird.f32 %v2242
    %vm2249 = vmor %vm2247, %vm2248
    %v2250 = vsel %vm2249, %v2242, %v2246
    %v2251 = vand.u32 2147483647, %v2109
    %vm2252 = vcmp.eq.f32.partialorder %v2251, 8.507059e+37
    %v2253 = vand.u32 %v2109, 2147483648
    %v2254 = vor.u32 1.1754944e-38, %v2253
    %v2255 = vsel %vm2252, %v2254, %v2250
    %v2256 = vrcp.pop %v2110
    %v2257 = vmul.f32 %v2110, %v2256
    %v2258 = vsub.f32 1.0, %v2257
    %v2259 = vmul.f32 %v2256, %v2258
    %v2260 = vadd.f32 %v2256, %v2259
    %vm2261 = vweird.f32 %v2110
    %vm2262 = vweird.f32 %v2256
    %vm2263 = vmor %vm2261, %vm2262
    %v2264 = vsel %vm2263, %v2256, %v2260
    %v2265 = vand.u32 2147483647, %v2110
    %vm2266 = vcmp.eq.f32.partialorder %v2265, 8.507059e+37
    %v2267 = vand.u32 %v2110, 2147483648
    %v2268 = vor.u32 1.1754944e-38, %v2267
    %v2269 = vsel %vm2266, %v2268, %v2264
    %v2270 = vrcp.pop %v2111
    %v2271 = vmul.f32 %v2111, %v2270
    %v2272 = vsub.f32 1.0, %v2271
    %v2273 = vmul.f32 %v2270, %v2272
    %v2274 = vadd.f32 %v2270, %v2273
    %vm2275 = vweird.f32 %v2111
    %vm2276 = vweird.f32 %v2270
    %vm2277 = vmor %vm2275, %vm2276
    %v2278 = vsel %vm2277, %v2270, %v2274
    %v2279 = vand.u32 2147483647, %v2111
    %vm2280 = vcmp.eq.f32.partialorder %v2279, 8.507059e+37
    %v2281 = vand.u32 %v2111, 2147483648
    %v2282 = vor.u32 1.1754944e-38, %v2281
    %v2283 = vsel %vm2280, %v2282, %v2278
    %v2284 = vrcp.pop %v2112
    %v2285 = vmul.f32 %v2112, %v2284
    %v2286 = vsub.f32 1.0, %v2285
    %v2287 = vmul.f32 %v2284, %v2286
    %v2288 = vadd.f32 %v2284, %v2287
    %vm2289 = vweird.f32 %v2112
    %vm2290 = vweird.f32 %v2284
    %vm2291 = vmor %vm2289, %vm2290
    %v2292 = vsel %vm2291, %v2284, %v2288
    %v2293 = vand.u32 2147483647, %v2112
    %vm2294 = vcmp.eq.f32.partialorder %v2293, 8.507059e+37
    %v2295 = vand.u32 %v2112, 2147483648
    %v2296 = vor.u32 1.1754944e-38, %v2295
    %v2297 = vsel %vm2294, %v2296, %v2292
    %v2298 = vrcp.pop %v2113
    %v2299 = vmul.f32 %v2113, %v2298
    %v2300 = vsub.f32 1.0, %v2299
    %v2301 = vmul.f32 %v2298, %v2300
    %v2302 = vadd.f32 %v2298, %v2301
    %vm2303 = vweird.f32 %v2113
    %vm2304 = vweird.f32 %v2298
    %vm2305 = vmor %vm2303, %vm2304
    %v2306 = vsel %vm2305, %v2298, %v2302
    %v2307 = vand.u32 2147483647, %v2113
    %vm2308 = vcmp.eq.f32.partialorder %v2307, 8.507059e+37
    %v2309 = vand.u32 %v2113, 2147483648
    %v2310 = vor.u32 1.1754944e-38, %v2309
    %v2311 = vsel %vm2308, %v2310, %v2306
    %v2312 = vrcp.pop %v2114
    %v2313 = vmul.f32 %v2114, %v2312
    %v2314 = vsub.f32 1.0, %v2313
    %v2315 = vmul.f32 %v2312, %v2314
    %v2316 = vadd.f32 %v2312, %v2315
    %vm2317 = vweird.f32 %v2114
    %vm2318 = vweird.f32 %v2312
    %vm2319 = vmor %vm2317, %vm2318
    %v2320 = vsel %vm2319, %v2312, %v2316
    %v2321 = vand.u32 2147483647, %v2114
    %vm2322 = vcmp.eq.f32.partialorder %v2321, 8.507059e+37
    %v2323 = vand.u32 %v2114, 2147483648
    %v2324 = vor.u32 1.1754944e-38, %v2323
    %v2325 = vsel %vm2322, %v2324, %v2320
    %v2326 = vrcp.pop %v2115
    %v2327 = vmul.f32 %v2115, %v2326
    %v2328 = vsub.f32 1.0, %v2327
    %v2329 = vmul.f32 %v2326, %v2328
    %v2330 = vadd.f32 %v2326, %v2329
    %vm2331 = vweird.f32 %v2115
    %vm2332 = vweird.f32 %v2326
    %vm2333 = vmor %vm2331, %vm2332
    %v2334 = vsel %vm2333, %v2326, %v2330
    %v2335 = vand.u32 2147483647, %v2115
    %vm2336 = vcmp.eq.f32.partialorder %v2335, 8.507059e+37
    %v2337 = vand.u32 %v2115, 2147483648
    %v2338 = vor.u32 1.1754944e-38, %v2337
    %v2339 = vsel %vm2336, %v2338, %v2334
    %v2344 = vperm.slane %v2129, %v1094
    %v2345 = vperm.slane %v2143, %v1096
    %v2346 = vsel %vm1098, %v2345, %v2344
    %v2347 = vperm.slane %v2157, %v1100
    %v2348 = vsel %vm1102, %v2347, %v2346
    %v2349 = vperm.slane %v2171, %v1104
    %v2350 = vsel %vm1106, %v2349, %v2348
    %v2351 = vsel %vm704, %v2350, 0
    %2353 = vmatpush.msra.mxu0 0.0
    %2354 = vmatpush.msra.mxu0 0.0
    %2355 = vmatpush.msra.mxu0 0.0
    %2356 = vmatpush.msra.mxu0 0.0
    %2357 = vmatpush.msra.mxu0 0.0
    %2358 = vmatpush.msra.mxu0 0.0
    %2359 = vmatpush.msra.mxu0 0.0
    %2360 = vmatpush.msra.mxu0 0.0
    %2361 = vmatpush.msra.mxu0 0.0
    %2362 = vmatpush.msra.mxu0 0.0
    %2363 = vmatpush.msra.mxu0 0.0
    %2364 = vmatpush.msra.mxu0 0.0
    %2365 = vmatpush.msra.mxu0 %v2027
    %2366 = vmatpush.msra.mxu0 %v2025
    %2367 = vmatpush.msra.mxu0 %v2023
    %2368 = vmatpush.msra.mxu0 %v2021
    %2369 = vmatmul.f32.gmra.mxu0 %v2351
    %v2370 = vpop.f32.mrf.mxu0
    %v2371 = vadd.f32 0.0, %v2370
    %2372 = vdwg.mxu0
    %v2377 = vperm.slane %v2185, %v1094
    %v2378 = vperm.slane %v2199, %v1096
    %v2379 = vsel %vm1098, %v2378, %v2377
    %v2380 = vperm.slane %v2213, %v1100
    %v2381 = vsel %vm1102, %v2380, %v2379
    %v2382 = vperm.slane %v2227, %v1104
    %v2383 = vsel %vm1106, %v2382, %v2381
    %v2384 = vsel %vm704, %v2383, 0
    %2386 = vmatpush.msra.mxu0 0.0
    %2387 = vmatpush.msra.mxu0 0.0
    %2388 = vmatpush.msra.mxu0 0.0
    %2389 = vmatpush.msra.mxu0 0.0
    %2390 = vmatpush.msra.mxu0 0.0
    %2391 = vmatpush.msra.mxu0 0.0
    %2392 = vmatpush.msra.mxu0 0.0
    %2393 = vmatpush.msra.mxu0 0.0
    %2394 = vmatpush.msra.mxu0 0.0
    %2395 = vmatpush.msra.mxu0 0.0
    %2396 = vmatpush.msra.mxu0 0.0
    %2397 = vmatpush.msra.mxu0 0.0
    %2398 = vmatpush.msra.mxu0 %v2035
    %2399 = vmatpush.msra.mxu0 %v2033
    %2400 = vmatpush.msra.mxu0 %v2031
    %2401 = vmatpush.msra.mxu0 %v2029
    %2402 = vmatmul.f32.gmra.mxu0 %v2384
    %v2403 = vpop.f32.mrf.mxu0
    %v2404 = vadd.f32 0.0, %v2403
    %2405 = vdwg.mxu0
    %v2410 = vperm.slane %v2241, %v1094
    %v2411 = vperm.slane %v2255, %v1096
    %v2412 = vsel %vm1098, %v2411, %v2410
    %v2413 = vperm.slane %v2269, %v1100
    %v2414 = vsel %vm1102, %v2413, %v2412
    %v2415 = vperm.slane %v2283, %v1104
    %v2416 = vsel %vm1106, %v2415, %v2414
    %v2417 = vsel %vm704, %v2416, 0
    %2419 = vmatpush.msra.mxu0 0.0
    %2420 = vmatpush.msra.mxu0 0.0
    %2421 = vmatpush.msra.mxu0 0.0
    %2422 = vmatpush.msra.mxu0 0.0
    %2423 = vmatpush.msra.mxu0 0.0
    %2424 = vmatpush.msra.mxu0 0.0
    %2425 = vmatpush.msra.mxu0 0.0
    %2426 = vmatpush.msra.mxu0 0.0
    %2427 = vmatpush.msra.mxu0 0.0
    %2428 = vmatpush.msra.mxu0 0.0
    %2429 = vmatpush.msra.mxu0 0.0
    %2430 = vmatpush.msra.mxu0 0.0
    %2431 = vmatpush.msra.mxu0 %v2043
    %2432 = vmatpush.msra.mxu0 %v2041
    %2433 = vmatpush.msra.mxu0 %v2039
    %2434 = vmatpush.msra.mxu0 %v2037
    %2435 = vmatmul.f32.gmra.mxu0 %v2417
    %v2436 = vpop.f32.mrf.mxu0
    %v2437 = vadd.f32 0.0, %v2436
    %2438 = vdwg.mxu0
    %v2443 = vperm.slane %v2297, %v1094
    %v2444 = vperm.slane %v2311, %v1096
    %v2445 = vsel %vm1098, %v2444, %v2443
    %v2446 = vperm.slane %v2325, %v1100
    %v2447 = vsel %vm1102, %v2446, %v2445
    %v2448 = vperm.slane %v2339, %v1104
    %v2449 = vsel %vm1106, %v2448, %v2447
    %v2450 = vsel %vm704, %v2449, 0
    %2452 = vmatpush.msra.mxu0 0.0
    %2453 = vmatpush.msra.mxu0 0.0
    %2454 = vmatpush.msra.mxu0 0.0
    %2455 = vmatpush.msra.mxu0 0.0
    %2456 = vmatpush.msra.mxu0 0.0
    %2457 = vmatpush.msra.mxu0 0.0
    %2458 = vmatpush.msra.mxu0 0.0
    %2459 = vmatpush.msra.mxu0 0.0
    %2460 = vmatpush.msra.mxu0 0.0
    %2461 = vmatpush.msra.mxu0 0.0
    %2462 = vmatpush.msra.mxu0 0.0
    %2463 = vmatpush.msra.mxu0 0.0
    %2464 = vmatpush.msra.mxu0 %v2051
    %2465 = vmatpush.msra.mxu0 %v2049
    %2466 = vmatpush.msra.mxu0 %v2047
    %2467 = vmatpush.msra.mxu0 %v2045
    %2468 = vmatmul.f32.gmra.mxu0 %v2450
    %v2469 = vpop.f32.mrf.mxu0
    %v2470 = vadd.f32 0.0, %v2469
    %2471 = vdwg.mxu0
    %v2473 = vsel %vm704, %v2371, 0
    %v2476 = vsel %vm704, %v1676, 0
    %v2479 = vsel %vm704, %v1679, 0
    %v2482 = vsel %vm704, %v1682, 0
    %v2485 = vsel %vm704, %v1685, 0
    %2487 = vmatpush.xpose.msra.mxu0 0.0
    %2488 = vmatpush.xpose.msra.mxu0 0.0
    %2489 = vmatpush.xpose.msra.mxu0 0.0
    %2490 = vmatpush.xpose.msra.mxu0 0.0
    %2491 = vmatpush.xpose.msra.mxu0 0.0
    %2492 = vmatpush.xpose.msra.mxu0 0.0
    %2493 = vmatpush.xpose.msra.mxu0 0.0
    %2494 = vmatpush.xpose.msra.mxu0 0.0
    %2495 = vmatpush.xpose.msra.mxu0 0.0
    %2496 = vmatpush.xpose.msra.mxu0 0.0
    %2497 = vmatpush.xpose.msra.mxu0 0.0
    %2498 = vmatpush.xpose.msra.mxu0 0.0
    %2499 = vmatpush.xpose.msra.mxu0 %v2485
    %2500 = vmatpush.xpose.msra.mxu0 %v2482
    %2501 = vmatpush.xpose.msra.mxu0 %v2479
    %2502 = vmatpush.xpose.msra.mxu0 %v2476
    %2503 = vmatmul.f32.gmra.mxu0 %v2473
    %v2504 = vpop.f32.mrf.mxu0
    %v2505 = vadd.f32 0.0, %v2504
    %2506 = vdwg.mxu0
    %v2508 = vsel %vm704, %v2404, 0
    %v2511 = vsel %vm704, %v1711, 0
    %v2514 = vsel %vm704, %v1714, 0
    %v2517 = vsel %vm704, %v1717, 0
    %v2520 = vsel %vm704, %v1720, 0
    %2522 = vmatpush.xpose.msra.mxu0 0.0
    %2523 = vmatpush.xpose.msra.mxu0 0.0
    %2524 = vmatpush.xpose.msra.mxu0 0.0
    %2525 = vmatpush.xpose.msra.mxu0 0.0
    %2526 = vmatpush.xpose.msra.mxu0 0.0
    %2527 = vmatpush.xpose.msra.mxu0 0.0
    %2528 = vmatpush.xpose.msra.mxu0 0.0
    %2529 = vmatpush.xpose.msra.mxu0 0.0
    %2530 = vmatpush.xpose.msra.mxu0 0.0
    %2531 = vmatpush.xpose.msra.mxu0 0.0
    %2532 = vmatpush.xpose.msra.mxu0 0.0
    %2533 = vmatpush.xpose.msra.mxu0 0.0
    %2534 = vmatpush.xpose.msra.mxu0 %v2520
    %2535 = vmatpush.xpose.msra.mxu0 %v2517
    %2536 = vmatpush.xpose.msra.mxu0 %v2514
    %2537 = vmatpush.xpose.msra.mxu0 %v2511
    %2538 = vmatmul.f32.gmra.mxu0 %v2508
    %v2539 = vpop.f32.mrf.mxu0
    %v2540 = vadd.f32 0.0, %v2539
    %2541 = vdwg.mxu0
    %v2543 = vsel %vm704, %v2437, 0
    %v2546 = vsel %vm704, %v1746, 0
    %v2549 = vsel %vm704, %v1749, 0
    %v2552 = vsel %vm704, %v1752, 0
    %v2555 = vsel %vm704, %v1755, 0
    %2557 = vmatpush.xpose.msra.mxu0 0.0
    %2558 = vmatpush.xpose.msra.mxu0 0.0
    %2559 = vmatpush.xpose.msra.mxu0 0.0
    %2560 = vmatpush.xpose.msra.mxu0 0.0
    %2561 = vmatpush.xpose.msra.mxu0 0.0
    %2562 = vmatpush.xpose.msra.mxu0 0.0
    %2563 = vmatpush.xpose.msra.mxu0 0.0
    %2564 = vmatpush.xpose.msra.mxu0 0.0
    %2565 = vmatpush.xpose.msra.mxu0 0.0
    %2566 = vmatpush.xpose.msra.mxu0 0.0
    %2567 = vmatpush.xpose.msra.mxu0 0.0
    %2568 = vmatpush.xpose.msra.mxu0 0.0
    %2569 = vmatpush.xpose.msra.mxu0 %v2555
    %2570 = vmatpush.xpose.msra.mxu0 %v2552
    %2571 = vmatpush.xpose.msra.mxu0 %v2549
    %2572 = vmatpush.xpose.msra.mxu0 %v2546
    %2573 = vmatmul.f32.gmra.mxu0 %v2543
    %v2574 = vpop.f32.mrf.mxu0
    %v2575 = vadd.f32 0.0, %v2574
    %2576 = vdwg.mxu0
    %v2578 = vsel %vm704, %v2470, 0
    %v2581 = vsel %vm704, %v1781, 0
    %v2584 = vsel %vm704, %v1784, 0
    %v2587 = vsel %vm704, %v1787, 0
    %v2590 = vsel %vm704, %v1790, 0
    %2592 = vmatpush.xpose.msra.mxu0 0.0
    %2593 = vmatpush.xpose.msra.mxu0 0.0
    %2594 = vmatpush.xpose.msra.mxu0 0.0
    %2595 = vmatpush.xpose.msra.mxu0 0.0
    %2596 = vmatpush.xpose.msra.mxu0 0.0
    %2597 = vmatpush.xpose.msra.mxu0 0.0
    %2598 = vmatpush.xpose.msra.mxu0 0.0
    %2599 = vmatpush.xpose.msra.mxu0 0.0
    %2600 = vmatpush.xpose.msra.mxu0 0.0
    %2601 = vmatpush.xpose.msra.mxu0 0.0
    %2602 = vmatpush.xpose.msra.mxu0 0.0
    %2603 = vmatpush.xpose.msra.mxu0 0.0
    %2604 = vmatpush.xpose.msra.mxu0 %v2590
    %2605 = vmatpush.xpose.msra.mxu0 %v2587
    %2606 = vmatpush.xpose.msra.mxu0 %v2584
    %2607 = vmatpush.xpose.msra.mxu0 %v2581
    %2608 = vmatmul.f32.gmra.mxu0 %v2578
    %v2609 = vpop.f32.mrf.mxu0
    %v2610 = vadd.f32 0.0, %v2609
    %2611 = vdwg.mxu0
    %v2616 = vrot.slane %v2540, 7
    %v2617 = vsel %vm1374, %v2616, %v2505
    %v2618 = vrot.slane %v2610, 7
    %v2619 = vsel %vm1374, %v2618, %v2575
    %v2622 = vsel %vm1380, %v2617, 0.0
    %v2623 = vrot.slane %v2622, 4
    %v2624 = vadd.f32 %v2622, %v2623
    %v2625 = vrot.slane %v2624, 2
    %v2626 = vadd.f32 %v2624, %v2625
    %v2627 = vrot.slane %v2626, 1
    %v2628 = vadd.f32 %v2626, %v2627
    %v2629 = vsel %vm1380, %v2619, 0.0
    %v2630 = vrot.slane %v2629, 4
    %v2631 = vadd.f32 %v2629, %v2630
    %v2632 = vrot.slane %v2631, 2
    %v2633 = vadd.f32 %v2631, %v2632
    %v2634 = vrot.slane %v2633, 1
    %v2635 = vadd.f32 %v2633, %v2634
    %v2638 = vrot.slane %v1394, 7
    %v2639 = vsel %vm1374, %v2638, %v1387
    %v2643 = vrot.slane %v2635, 7
    %v2644 = vsel %vm1374, %v2643, %v2628
    %2645 = vrot.lane.b32.xlu0 %v2644, 32
    %v2646 = vpop.permute.xlu0 %2645
    %v2648 = vsel %vm704, %v2639, %v2646
    %vm2649 = vcmask 517120
    %2650 = vst.msk [vmem:[%s8] sm:$0x3] %vm2649, %v2648
    // Predicated region
    $region46: #{_cross_attn_forward.1} parent=1 // pred_check
      _
    $region47: #{_cross_attn_forward.1} parent=1 // pred_check_branch
      %2652 = sbr.rel (0) target = $region49
    $region48: #{_cross_attn_forward.1} parent=1 // pred_region
      _
    $region49: #{_cross_attn_forward.1} parent=1 // pred_fallthru
      _
    // Predicated region
    $region50: #{_cross_attn_forward.1} parent=1 // pred_check
      _
    $region51: #{_cross_attn_forward.1} parent=1 // pred_check_branch
      %2654 = sbr.rel (0) target = $region53
    $region52: #{_cross_attn_forward.1} parent=1 // pred_region
      _
    $region53: #{_cross_attn_forward.1} parent=1 // pred_fallthru
      _
    %2655 = vsyncpa [#allocation3], 1
    %2656 = vsyncpa [#allocation5], 1

</llo_original>
